<compile_context>
chip_gen: v7x
topology: tpu7x:2x2x1
jax: 0.10.0
libtpu: 0.0.40
codegen_flags: <defaults>
</compile_context>

<pallas_src>
import jax
import jax.numpy as jnp
from jax.experimental import pallas as pl
from jax.experimental.pallas import tpu as pltpu

RMS_EPS = 1e-6
MAX_ROW_TILE = 1024              # rows per grid step (multiple of 8)
MATMUL_DTYPE = jnp.bfloat16      # MXU operand dtype; accumulation / norm / head stay f32
VMEM_BUDGET = 40 * 1024 * 1024   # conservative cross-generation cap (v7x: 64 MiB physical)


def _round_up(n, m):
    return ((n + m - 1) // m) * m


def termination_kernel(x_ref, w0_ref, b0_ref, g0_ref, w1_ref, b1_ref, g1_ref,
                       wh_ref, bh_ref, out_ref):
    """x_ref: (rows, D) bf16; w0: (D, H) bf16; w1: (H, H) bf16;
    b*/g*/wh: (1, H) f32; bh: (1, 1) f32; out_ref: (1, 1, rows) f32 (lane-dense)."""

    def layer(x_mm, w_ref, b_ref, g_ref):
        # Linear (bf16 MXU operands, f32 accumulation) -> RMSNorm (f32) -> SiLU (f32)
        h = jnp.dot(x_mm, w_ref[...], preferred_element_type=jnp.float32)
        h = h + b_ref[...]
        h = h * jax.lax.rsqrt(jnp.mean(h * h, axis=-1, keepdims=True) + RMS_EPS)
        h = h * g_ref[...]
        return h * jax.nn.sigmoid(h)                    # SiLU

    x = layer(x_ref[...], w0_ref, b0_ref, g0_ref)       # x_ref already bf16
    x = layer(x.astype(MATMUL_DTYPE), w1_ref, b1_ref, g1_ref)

    # Head (hidden -> 1): VPU multiply + XLU lane reduction (avoids a 1-column MXU pass),
    # then one small sublane->lane transpose so the store is lane-dense.
    t = jnp.sum(x * wh_ref[...], axis=-1, keepdims=True) + bh_ref[...]      # (rows, 1)
    out_ref[...] = jnp.transpose(t).reshape(out_ref.shape).astype(out_ref.dtype)


def _vmem_bytes(row_tile, D, H):
    """Exact-ish resident-VMEM estimate for the chosen tiling."""
    x_in  = 2 * row_tile * D * 2                        # double-buffered bf16 input tiles
    wgt   = (D * H + H * H) * 2                         # bf16 weights, single-buffered
    vecs  = (5 * H + 1) * 4                             # f32 biases / gains / head w + b
    inter = 3 * row_tile * H * 4 + row_tile * H * 2     # live f32 temps + bf16 cast temp
    out   = 2 * row_tile * 4                            # double-buffered f32 output rows
    return x_in + wgt + vecs + inter + out


@jax.jit
def termination_head(feat, params):
    """feat: (B, L, D) float32 -> termination logits (B, L) float32."""
    B, L, D = feat.shape
    N = B * L
    H = params["w0"].shape[1]

    # Halve HBM traffic of the dominant tensors; numerics identical to an in-kernel cast.
    x = feat.reshape(N, D).astype(MATMUL_DTYPE)
    w0 = params["w0"].astype(MATMUL_DTYPE)
    w1 = params["w1"].astype(MATMUL_DTYPE)

    # Row tile: as large as possible (per-grid-step overhead ~0.35 us), but
    #   * one grid step when the whole problem fits a single tile (N <= 512),
    #   * >= 2 tiles when N > 512 so both v7x TensorCores get work on the parallel axis,
    #   * clamped by the VMEM budget.
    row_tile = min(MAX_ROW_TILE, _round_up(N, 8))
    if N > 512:
        row_tile = min(row_tile, _round_up((N + 1) // 2, 8))
    while row_tile > 8 and _vmem_bytes(row_tile, D, H) > VMEM_BUDGET:
        row_tile = _round_up(row_tile // 2, 8)
    num_tiles = pl.cdiv(N, row_tile)

    # TODO(synk): for very large H (bf16 w1 alone nears v7x's 64 MiB around H ~ 5.5k) the
    # second layer needs K-tiling over an "arbitrary" grid axis with an f32 accumulator.

    vmem_limit = int(min(max(_vmem_bytes(row_tile, D, H) + (2 << 20), 8 << 20), 48 << 20))

    full = lambda i: (0, 0)                              # grid-invariant blocks
    const = dict(pipeline_mode=pl.Buffered(buffer_count=1))

    out = pl.pallas_call(
        termination_kernel,
        out_shape=jax.ShapeDtypeStruct((num_tiles, 1, row_tile), jnp.float32),
        grid_spec=pltpu.PrefetchScalarGridSpec(
            num_scalar_prefetch=0,
            grid=(num_tiles,),
            in_specs=[
                pl.BlockSpec((row_tile, D), lambda i: (i, 0)),   # x rows (bf16)
                pl.BlockSpec((D, H), full, **const),             # w0 (bf16)
                pl.BlockSpec((1, H), full, **const),             # b0
                pl.BlockSpec((1, H), full, **const),             # RMSNorm gain 0
                pl.BlockSpec((H, H), full, **const),             # w1 (bf16)
                pl.BlockSpec((1, H), full, **const),             # b1
                pl.BlockSpec((1, H), full, **const),             # RMSNorm gain 1
                pl.BlockSpec((1, H), full, **const),             # head weight (row layout)
                pl.BlockSpec((1, 1), full, **const),             # head bias
            ],
            out_specs=pl.BlockSpec((1, 1, row_tile), lambda i: (i, 0, 0)),
        ),
        compiler_params=pltpu.CompilerParams(
            dimension_semantics=("parallel",),   # shard row tiles across v7x TCs
            vmem_limit_bytes=vmem_limit),
    )(x, w0, params["b0"], params["g0"], w1, params["b1"], params["g1"],
      params["wh"], params["bh"])

    # lane-dense (num_tiles, 1, row_tile) -> flatten, drop tile padding, restore (B, L)
    return out.reshape(-1)[:N].reshape(B, L)


def init_params(key, inp_dim, hidden_units):
    # layer_num = 2; as in the PyTorch module every backbone Linear maps
    # inp_dim -> hidden_units, so inp_dim must equal hidden_units for layer_num > 1.
    k0, k1, k2, k3, k4, k5 = jax.random.split(key, 6)
    s0 = 1.0 / jnp.sqrt(inp_dim)
    s1 = 1.0 / jnp.sqrt(hidden_units)
    return {
        "w0": jax.random.uniform(k0, (inp_dim, hidden_units), jnp.float32, -s0, s0),
        "b0": jax.random.uniform(k1, (1, hidden_units), jnp.float32, -s0, s0),
        "g0": jnp.ones((1, hidden_units), jnp.float32),      # RMSNorm weight
        "w1": jax.random.uniform(k2, (hidden_units, hidden_units), jnp.float32, -s1, s1),
        "b1": jax.random.uniform(k3, (1, hidden_units), jnp.float32, -s1, s1),
        "g1": jnp.ones((1, hidden_units), jnp.float32),
        "wh": jax.random.uniform(k4, (1, hidden_units), jnp.float32, -s1, s1),  # head W
        "bh": jax.random.uniform(k5, (1, 1), jnp.float32, -s1, s1),             # head b
    }


def _reference(feat, params):
    """Pure-JAX f32 reference matching the PyTorch module (act = SiLU)."""
    x = feat.reshape(-1, feat.shape[-1]).astype(jnp.float32)
    for w, b, g in (("w0", "b0", "g0"), ("w1", "b1", "g1")):
        h = x @ params[w] + params[b]
        h = h * jax.lax.rsqrt(jnp.mean(h * h, axis=-1, keepdims=True) + RMS_EPS) * params[g]
        x = h * jax.nn.sigmoid(h)
    t = jnp.sum(x * params["wh"], axis=-1) + params["bh"][0, 0]
    return t.reshape(feat.shape[:-1])


if __name__ == "__main__":
    key = jax.random.PRNGKey(0)
    k_feat, k_param = jax.random.split(key)

    # Small but multi-tile: N = B*L = 600 rows -> two 304-row tiles (second is partial),
    # inp_dim == hidden_units (required by the module for layer_num = 2).
    B, L, D, H = 2, 300, 32, 32
    feat = jax.random.normal(k_feat, (B, L, D), jnp.float32)
    params = init_params(k_param, D, H)

    out = termination_head(feat, params)
    out = jax.block_until_ready(out)

    ref = _reference(feat, params)
    assert out.shape == (B, L)
    # bf16 MXU operands / bf16 activations (f32 accumulation & norm) -> relaxed tolerance.
    assert jnp.allclose(out, ref, atol=5e-2, rtol=5e-2)

    print("KERNEL_OK")
</pallas_src>

<mosaic_0001>
module attributes {stable_mosaic.version = 11 : i64} {
  func.func @termination_kernel(%arg0: i32, %arg1: memref<304x32xbf16, #tpu.memory_space<vmem>>, %arg2: memref<32x32xbf16, #tpu.memory_space<vmem>>, %arg3: memref<1x32xf32, #tpu.memory_space<vmem>>, %arg4: memref<1x32xf32, #tpu.memory_space<vmem>>, %arg5: memref<32x32xbf16, #tpu.memory_space<vmem>>, %arg6: memref<1x32xf32, #tpu.memory_space<vmem>>, %arg7: memref<1x32xf32, #tpu.memory_space<vmem>>, %arg8: memref<1x32xf32, #tpu.memory_space<vmem>>, %arg9: memref<1x1xf32, #tpu.memory_space<vmem>>, %arg10: memref<1x1x304xf32, #tpu.memory_space<vmem>>) attributes {dimension_semantics = [#tpu.dimension_semantics<parallel>], iteration_bounds = array<i64: 2>, scalar_prefetch = 0 : i64, scratch_operands = 0 : i64, tpu.core_type = #tpu.core_type<tc>, window_params = [{transform_indices = @transform_0, window_bounds = array<i64: 304, 32>}, {pipeline_mode = #tpu.pipeline_mode<synchronous>, transform_indices = @transform_1, window_bounds = array<i64: 32, 32>}, {pipeline_mode = #tpu.pipeline_mode<synchronous>, transform_indices = @transform_2, window_bounds = array<i64: 1, 32>}, {pipeline_mode = #tpu.pipeline_mode<synchronous>, transform_indices = @transform_3, window_bounds = array<i64: 1, 32>}, {pipeline_mode = #tpu.pipeline_mode<synchronous>, transform_indices = @transform_4, window_bounds = array<i64: 32, 32>}, {pipeline_mode = #tpu.pipeline_mode<synchronous>, transform_indices = @transform_5, window_bounds = array<i64: 1, 32>}, {pipeline_mode = #tpu.pipeline_mode<synchronous>, transform_indices = @transform_6, window_bounds = array<i64: 1, 32>}, {pipeline_mode = #tpu.pipeline_mode<synchronous>, transform_indices = @transform_7, window_bounds = array<i64: 1, 32>}, {pipeline_mode = #tpu.pipeline_mode<synchronous>, transform_indices = @transform_8, window_bounds = array<i64: 1, 1>}, {transform_indices = @transform_9, window_bounds = array<i64: 1, 1, 304>}]} {
    %c0 = arith.constant 0 : index
    %c0_0 = arith.constant 0 : index
    %0 = vector.load %arg1[%c0, %c0_0] : memref<304x32xbf16, #tpu.memory_space<vmem>>, vector<304x32xbf16>
    %c0_1 = arith.constant 0 : index
    %c0_2 = arith.constant 0 : index
    %1 = vector.load %arg2[%c0_1, %c0_2] : memref<32x32xbf16, #tpu.memory_space<vmem>>, vector<32x32xbf16>
    %cst = arith.constant dense<0.000000e+00> : vector<304x32xf32>
    %2 = tpu.matmul %0, %1, %cst {dimension_numbers = #tpu.dot_dimension_numbers<[1], [0], [0], [1], [0, 0, 1, 1], [], []>} : vector<304x32xbf16>, vector<32x32xbf16>, vector<304x32xf32> -> vector<304x32xf32>
    %c0_3 = arith.constant 0 : index
    %c0_4 = arith.constant 0 : index
    %3 = vector.load %arg3[%c0_3, %c0_4] : memref<1x32xf32, #tpu.memory_space<vmem>>, vector<1x32xf32>
    %4 = vector.broadcast %3 : vector<1x32xf32> to vector<304x32xf32>
    %5 = arith.addf %2, %4 : vector<304x32xf32>
    %6 = arith.mulf %5, %5 : vector<304x32xf32>
    %cst_5 = arith.constant dense<0.000000e+00> : vector<304xf32>
    %7 = vector.multi_reduction <add>, %6, %cst_5 [1] : vector<304x32xf32> to vector<304xf32>
    %8 = vector.shape_cast %7 : vector<304xf32> to vector<304x1xf32>
    %cst_6 = arith.constant 3.200000e+01 : f32
    %9 = vector.broadcast %cst_6 : f32 to vector<304x1xf32>
    %10 = arith.divf %8, %9 : vector<304x1xf32>
    %cst_7 = arith.constant 9.99999997E-7 : f32
    %11 = vector.broadcast %cst_7 : f32 to vector<304x1xf32>
    %12 = arith.addf %10, %11 : vector<304x1xf32>
    %13 = math.rsqrt %12 : vector<304x1xf32>
    %14 = vector.broadcast %13 : vector<304x1xf32> to vector<304x32xf32>
    %15 = arith.mulf %5, %14 : vector<304x32xf32>
    %c0_8 = arith.constant 0 : index
    %c0_9 = arith.constant 0 : index
    %16 = vector.load %arg4[%c0_8, %c0_9] : memref<1x32xf32, #tpu.memory_space<vmem>>, vector<1x32xf32>
    %17 = vector.broadcast %16 : vector<1x32xf32> to vector<304x32xf32>
    %18 = arith.mulf %15, %17 : vector<304x32xf32>
    %19 = arith.negf %18 : vector<304x32xf32>
    %20 = math.exp %19 : vector<304x32xf32>
    %cst_10 = arith.constant 1.000000e+00 : f32
    %21 = vector.broadcast %cst_10 : f32 to vector<304x32xf32>
    %22 = arith.addf %21, %20 : vector<304x32xf32>
    %23 = arith.divf %21, %22 : vector<304x32xf32>
    %24 = arith.mulf %18, %23 : vector<304x32xf32>
    %25 = arith.truncf %24 : vector<304x32xf32> to vector<304x32xbf16>
    %c0_11 = arith.constant 0 : index
    %c0_12 = arith.constant 0 : index
    %26 = vector.load %arg5[%c0_11, %c0_12] : memref<32x32xbf16, #tpu.memory_space<vmem>>, vector<32x32xbf16>
    %cst_13 = arith.constant dense<0.000000e+00> : vector<304x32xf32>
    %27 = tpu.matmul %25, %26, %cst_13 {dimension_numbers = #tpu.dot_dimension_numbers<[1], [0], [0], [1], [0, 0, 1, 1], [], []>} : vector<304x32xbf16>, vector<32x32xbf16>, vector<304x32xf32> -> vector<304x32xf32>
    %c0_14 = arith.constant 0 : index
    %c0_15 = arith.constant 0 : index
    %28 = vector.load %arg6[%c0_14, %c0_15] : memref<1x32xf32, #tpu.memory_space<vmem>>, vector<1x32xf32>
    %29 = vector.broadcast %28 : vector<1x32xf32> to vector<304x32xf32>
    %30 = arith.addf %27, %29 : vector<304x32xf32>
    %31 = arith.mulf %30, %30 : vector<304x32xf32>
    %cst_16 = arith.constant dense<0.000000e+00> : vector<304xf32>
    %32 = vector.multi_reduction <add>, %31, %cst_16 [1] : vector<304x32xf32> to vector<304xf32>
    %33 = vector.shape_cast %32 : vector<304xf32> to vector<304x1xf32>
    %cst_17 = arith.constant 3.200000e+01 : f32
    %34 = vector.broadcast %cst_17 : f32 to vector<304x1xf32>
    %35 = arith.divf %33, %34 : vector<304x1xf32>
    %cst_18 = arith.constant 9.99999997E-7 : f32
    %36 = vector.broadcast %cst_18 : f32 to vector<304x1xf32>
    %37 = arith.addf %35, %36 : vector<304x1xf32>
    %38 = math.rsqrt %37 : vector<304x1xf32>
    %39 = vector.broadcast %38 : vector<304x1xf32> to vector<304x32xf32>
    %40 = arith.mulf %30, %39 : vector<304x32xf32>
    %c0_19 = arith.constant 0 : index
    %c0_20 = arith.constant 0 : index
    %41 = vector.load %arg7[%c0_19, %c0_20] : memref<1x32xf32, #tpu.memory_space<vmem>>, vector<1x32xf32>
    %42 = vector.broadcast %41 : vector<1x32xf32> to vector<304x32xf32>
    %43 = arith.mulf %40, %42 : vector<304x32xf32>
    %44 = arith.negf %43 : vector<304x32xf32>
    %45 = math.exp %44 : vector<304x32xf32>
    %cst_21 = arith.constant 1.000000e+00 : f32
    %46 = vector.broadcast %cst_21 : f32 to vector<304x32xf32>
    %47 = arith.addf %46, %45 : vector<304x32xf32>
    %48 = arith.divf %46, %47 : vector<304x32xf32>
    %49 = arith.mulf %43, %48 : vector<304x32xf32>
    %c0_22 = arith.constant 0 : index
    %c0_23 = arith.constant 0 : index
    %50 = vector.load %arg8[%c0_22, %c0_23] : memref<1x32xf32, #tpu.memory_space<vmem>>, vector<1x32xf32>
    %51 = vector.broadcast %50 : vector<1x32xf32> to vector<304x32xf32>
    %52 = arith.mulf %49, %51 : vector<304x32xf32>
    %cst_24 = arith.constant dense<0.000000e+00> : vector<304xf32>
    %53 = vector.multi_reduction <add>, %52, %cst_24 [1] : vector<304x32xf32> to vector<304xf32>
    %54 = vector.shape_cast %53 : vector<304xf32> to vector<304x1xf32>
    %c0_25 = arith.constant 0 : index
    %c0_26 = arith.constant 0 : index
    %55 = vector.load %arg9[%c0_25, %c0_26] : memref<1x1xf32, #tpu.memory_space<vmem>>, vector<1x1xf32>
    %56 = vector.broadcast %55 : vector<1x1xf32> to vector<304x1xf32>
    %57 = arith.addf %54, %56 : vector<304x1xf32>
    %58 = tpu.transpose %57, [1, 0] : vector<304x1xf32> -> vector<1x304xf32>
    %59 = vector.shape_cast %58 : vector<1x304xf32> to vector<1x1x304xf32>
    %c0_27 = arith.constant 0 : index
    %c0_28 = arith.constant 0 : index
    %c0_29 = arith.constant 0 : index
    %60 = vector.load %arg10[%c0_27, %c0_28, %c0_29] : memref<1x1x304xf32, #tpu.memory_space<vmem>>, vector<1x1x304xf32>
    tpu.vector_store %arg10[%c0_27, %c0_28, %c0_29], %59 {strides = array<i32>} : memref<1x1x304xf32, #tpu.memory_space<vmem>>, vector<1x1x304xf32>,
    return
  }
  func.func @transform_0(%arg0: i32) -> (i32, i32) {
    %c0_i32 = arith.constant 0 : i32
    %c0_i32_0 = arith.constant 0 : i32
    return %arg0, %c0_i32 : i32, i32
  }
  func.func @transform_1(%arg0: i32) -> (i32, i32) {
    %c0_i32 = arith.constant 0 : i32
    %c0_i32_0 = arith.constant 0 : i32
    %c0_i32_1 = arith.constant 0 : i32
    return %c0_i32, %c0_i32_0 : i32, i32
  }
  func.func @transform_2(%arg0: i32) -> (i32, i32) {
    %c0_i32 = arith.constant 0 : i32
    %c0_i32_0 = arith.constant 0 : i32
    %c0_i32_1 = arith.constant 0 : i32
    return %c0_i32, %c0_i32_0 : i32, i32
  }
  func.func @transform_3(%arg0: i32) -> (i32, i32) {
    %c0_i32 = arith.constant 0 : i32
    %c0_i32_0 = arith.constant 0 : i32
    %c0_i32_1 = arith.constant 0 : i32
    return %c0_i32, %c0_i32_0 : i32, i32
  }
  func.func @transform_4(%arg0: i32) -> (i32, i32) {
    %c0_i32 = arith.constant 0 : i32
    %c0_i32_0 = arith.constant 0 : i32
    %c0_i32_1 = arith.constant 0 : i32
    return %c0_i32, %c0_i32_0 : i32, i32
  }
  func.func @transform_5(%arg0: i32) -> (i32, i32) {
    %c0_i32 = arith.constant 0 : i32
    %c0_i32_0 = arith.constant 0 : i32
    %c0_i32_1 = arith.constant 0 : i32
    return %c0_i32, %c0_i32_0 : i32, i32
  }
  func.func @transform_6(%arg0: i32) -> (i32, i32) {
    %c0_i32 = arith.constant 0 : i32
    %c0_i32_0 = arith.constant 0 : i32
    %c0_i32_1 = arith.constant 0 : i32
    return %c0_i32, %c0_i32_0 : i32, i32
  }
  func.func @transform_7(%arg0: i32) -> (i32, i32) {
    %c0_i32 = arith.constant 0 : i32
    %c0_i32_0 = arith.constant 0 : i32
    %c0_i32_1 = arith.constant 0 : i32
    return %c0_i32, %c0_i32_0 : i32, i32
  }
  func.func @transform_8(%arg0: i32) -> (i32, i32) {
    %c0_i32 = arith.constant 0 : i32
    %c0_i32_0 = arith.constant 0 : i32
    %c0_i32_1 = arith.constant 0 : i32
    return %c0_i32, %c0_i32_0 : i32, i32
  }
  func.func @transform_9(%arg0: i32) -> (i32, i32, i32) {
    %c0_i32 = arith.constant 0 : i32
    %c0_i32_0 = arith.constant 0 : i32
    %c0_i32_1 = arith.constant 0 : i32
    return %arg0, %c0_i32, %c0_i32_0 : i32, i32, i32
  }
}

</mosaic_0001>

<llo_original>
// kernel: termination_head.1
$region0: #{termination_head.1}
  #allocation0 [shape = 'u32[]', space=smem, size = 0x4, offset = 0x4, fixed_abs, tag = 'smem constant byte address 0x4 - core index']
  #allocation1 [shape = 'u32[144,128]{1,0:T(1,128)}', space=vmem, size = 0x12000, scoped, tag = 'internal scratch']
  #allocation2 [shape = 'f32[1,1]{1,0:T(1,128)S(1)}', space=vmem, size = 0x200, scoped, tag = 'scoped memory for termination_head.1']
  %s0 = inlined_call_operand.vmem [shape: bf16[600,32], index: 0, kind: input, shape index: {}]
  %s1 = inlined_call_operand.vmem [shape: bf16[32,32], index: 1, kind: input, shape index: {}]
  %s2 = inlined_call_operand.vmem [shape: f32[1,32], index: 2, kind: input, shape index: {}]
  %s3 = inlined_call_operand.vmem [shape: f32[1,32], index: 3, kind: input, shape index: {}]
  %s4 = inlined_call_operand.vmem [shape: bf16[32,32], index: 4, kind: input, shape index: {}]
  %s5 = inlined_call_operand.vmem [shape: f32[1,32], index: 5, kind: input, shape index: {}]
  %s6 = inlined_call_operand.vmem [shape: f32[1,32], index: 6, kind: input, shape index: {}]
  %s7 = inlined_call_operand.vmem [shape: f32[1,32], index: 7, kind: input, shape index: {}]
  %s8 = inlined_call_operand.<no memory space> [shape: f32[1,1], index: 8, kind: input, shape index: {}]
  %s9 = inlined_call_operand.vmem [shape: f32[2,1,304], index: 9, kind: output, shape index: {}]
  %s10 = sld [smem:[#allocation0]]
  $region69: #{termination_head.1} parent=0
    _
  %s12 = ssub.s32 1, %s10
  %s13 = scalar_select 0, %s12, %s10
  %v14 = vstv %s8
  %15 = vst [vmem:[#allocation2] sm:$0x1] %v14
  loop: start=0, step=1, limit=4
  $region2: #{termination_head.1} parent=0 // loop_pre_header
    _
  $region3: #{termination_head.1} parent=0 // loop_header
    %s17 = sphi 0, %s21
    %p18 = scmp.ge.s32.totalorder %s17, 4
    %s27 = sphi 0, %s29
    %s30 = sphi 0, %s27
    %s31 = sphi 0, %s30
    %s47 = sphi 0, %s31
    %s51 = sphi 0, %s51
    %s53 = sphi 0, %s51
    %s54 = sphi 0, %s53
    %s68 = sphi 0, %s54
    %s72 = sphi 0, %s72
    %s74 = sphi 0, %s72
    %s75 = sphi 0, %s74
    %s89 = sphi 0, %s75
    %s93 = sphi 0, %s93
    %s95 = sphi 0, %s93
    %s96 = sphi 0, %s95
    %s110 = sphi 0, %s96
    %s114 = sphi 0, %s114
    %s116 = sphi 0, %s114
    %s117 = sphi 0, %s116
    %s131 = sphi 0, %s117
    %s135 = sphi 0, %s135
    %s137 = sphi 0, %s135
    %s138 = sphi 0, %s137
    %s152 = sphi 0, %s138
    %s156 = sphi 0, %s156
    %s158 = sphi 0, %s156
    %s159 = sphi 0, %s158
    %s173 = sphi 0, %s159
    %s177 = sphi 0, %s177
    %s179 = sphi 0, %s177
    %s180 = sphi 0, %s179
    %s194 = sphi 0, %s180
    %s198 = sphi 0, %s198
    %s200 = sphi 0, %s198
    %s201 = sphi 0, %s200
    %s215 = sphi 0, %s201
    %s221 = sphi 0, %s223
    %s224 = sphi 0, %s221
    %s225 = sphi 0, %s224
    %s241 = sphi 0, %s225
  $region4: #{termination_head.1} parent=0 // loop_header_branch
    %20 = sbr.rel (%p18) target = $region8
  $region5: #{termination_head.1} parent=0 // loop_body
    %s22 = ssub.s32 %s17, 1
    %s23 = ssub.s32 %s17, 2
    %s24 = sadd.s32 %s17, 1
    %s25 = ssub.s32 %s17, %s24
    %p26 = scmp.eq.s32.totalorder %s25, 0
    %s28 = sadd.s32 %s27, 1
    %s29 = scalar_select %p26, %s27, %s28
    %p32 = pneg %p26
    %p33 = scmp.eq.s32.totalorder %s17, 1
    %p34 = por %p32, %p33
    %p35 = scmp.ne.s32.totalorder %s27, %s30
    %p36 = scmp.eq.s32.totalorder %s17, 0
    %p37 = por %p35, %p36
    %p38 = scmp.ne.s32.totalorder %s27, %s30
    %p39 = scmp.eq.s32.totalorder %s22, 1
    %p40 = por %p38, %p39
    %p41 = scmp.ne.s32.totalorder %s30, %s31
    %p42 = scmp.eq.s32.totalorder %s22, 0
    %p43 = por %p41, %p42
    %p44 = scmp.ne.s32.totalorder %s30, %s31
    %p45 = scmp.eq.s32.totalorder %s23, 1
    %p46 = por %p44, %p45
    %p48 = scmp.ne.s32.totalorder %s31, %s47
    %p49 = scmp.eq.s32.totalorder %s23, 0
    %p50 = por %p48, %p49
    %s52 = sadd.s32 %s51, 1
    %p55 = scmp.eq.s32.totalorder %s17, 1
    %p56 = scmp.ne.s32.totalorder %s51, %s53
    %p57 = scmp.eq.s32.totalorder %s17, 0
    %p58 = por %p56, %p57
    %p59 = scmp.ne.s32.totalorder %s51, %s53
    %p60 = scmp.eq.s32.totalorder %s22, 1
    %p61 = por %p59, %p60
    %p62 = scmp.ne.s32.totalorder %s53, %s54
    %p63 = scmp.eq.s32.totalorder %s22, 0
    %p64 = por %p62, %p63
    %p65 = scmp.ne.s32.totalorder %s53, %s54
    %p66 = scmp.eq.s32.totalorder %s23, 1
    %p67 = por %p65, %p66
    %p69 = scmp.ne.s32.totalorder %s54, %s68
    %p70 = scmp.eq.s32.totalorder %s23, 0
    %p71 = por %p69, %p70
    %s73 = sadd.s32 %s72, 1
    %p76 = scmp.eq.s32.totalorder %s17, 1
    %p77 = scmp.ne.s32.totalorder %s72, %s74
    %p78 = scmp.eq.s32.totalorder %s17, 0
    %p79 = por %p77, %p78
    %p80 = scmp.ne.s32.totalorder %s72, %s74
    %p81 = scmp.eq.s32.totalorder %s22, 1
    %p82 = por %p80, %p81
    %p83 = scmp.ne.s32.totalorder %s74, %s75
    %p84 = scmp.eq.s32.totalorder %s22, 0
    %p85 = por %p83, %p84
    %p86 = scmp.ne.s32.totalorder %s74, %s75
    %p87 = scmp.eq.s32.totalorder %s23, 1
    %p88 = por %p86, %p87
    %p90 = scmp.ne.s32.totalorder %s75, %s89
    %p91 = scmp.eq.s32.totalorder %s23, 0
    %p92 = por %p90, %p91
    %s94 = sadd.s32 %s93, 1
    %p97 = scmp.eq.s32.totalorder %s17, 1
    %p98 = scmp.ne.s32.totalorder %s93, %s95
    %p99 = scmp.eq.s32.totalorder %s17, 0
    %p100 = por %p98, %p99
    %p101 = scmp.ne.s32.totalorder %s93, %s95
    %p102 = scmp.eq.s32.totalorder %s22, 1
    %p103 = por %p101, %p102
    %p104 = scmp.ne.s32.totalorder %s95, %s96
    %p105 = scmp.eq.s32.totalorder %s22, 0
    %p106 = por %p104, %p105
    %p107 = scmp.ne.s32.totalorder %s95, %s96
    %p108 = scmp.eq.s32.totalorder %s23, 1
    %p109 = por %p107, %p108
    %p111 = scmp.ne.s32.totalorder %s96, %s110
    %p112 = scmp.eq.s32.totalorder %s23, 0
    %p113 = por %p111, %p112
    %s115 = sadd.s32 %s114, 1
    %p118 = scmp.eq.s32.totalorder %s17, 1
    %p119 = scmp.ne.s32.totalorder %s114, %s116
    %p120 = scmp.eq.s32.totalorder %s17, 0
    %p121 = por %p119, %p120
    %p122 = scmp.ne.s32.totalorder %s114, %s116
    %p123 = scmp.eq.s32.totalorder %s22, 1
    %p124 = por %p122, %p123
    %p125 = scmp.ne.s32.totalorder %s116, %s117
    %p126 = scmp.eq.s32.totalorder %s22, 0
    %p127 = por %p125, %p126
    %p128 = scmp.ne.s32.totalorder %s116, %s117
    %p129 = scmp.eq.s32.totalorder %s23, 1
    %p130 = por %p128, %p129
    %p132 = scmp.ne.s32.totalorder %s117, %s131
    %p133 = scmp.eq.s32.totalorder %s23, 0
    %p134 = por %p132, %p133
    %s136 = sadd.s32 %s135, 1
    %p139 = scmp.eq.s32.totalorder %s17, 1
    %p140 = scmp.ne.s32.totalorder %s135, %s137
    %p141 = scmp.eq.s32.totalorder %s17, 0
    %p142 = por %p140, %p141
    %p143 = scmp.ne.s32.totalorder %s135, %s137
    %p144 = scmp.eq.s32.totalorder %s22, 1
    %p145 = por %p143, %p144
    %p146 = scmp.ne.s32.totalorder %s137, %s138
    %p147 = scmp.eq.s32.totalorder %s22, 0
    %p148 = por %p146, %p147
    %p149 = scmp.ne.s32.totalorder %s137, %s138
    %p150 = scmp.eq.s32.totalorder %s23, 1
    %p151 = por %p149, %p150
    %p153 = scmp.ne.s32.totalorder %s138, %s152
    %p154 = scmp.eq.s32.totalorder %s23, 0
    %p155 = por %p153, %p154
    %s157 = sadd.s32 %s156, 1
    %p160 = scmp.eq.s32.totalorder %s17, 1
    %p161 = scmp.ne.s32.totalorder %s156, %s158
    %p162 = scmp.eq.s32.totalorder %s17, 0
    %p163 = por %p161, %p162
    %p164 = scmp.ne.s32.totalorder %s156, %s158
    %p165 = scmp.eq.s32.totalorder %s22, 1
    %p166 = por %p164, %p165
    %p167 = scmp.ne.s32.totalorder %s158, %s159
    %p168 = scmp.eq.s32.totalorder %s22, 0
    %p169 = por %p167, %p168
    %p170 = scmp.ne.s32.totalorder %s158, %s159
    %p171 = scmp.eq.s32.totalorder %s23, 1
    %p172 = por %p170, %p171
    %p174 = scmp.ne.s32.totalorder %s159, %s173
    %p175 = scmp.eq.s32.totalorder %s23, 0
    %p176 = por %p174, %p175
    %s178 = sadd.s32 %s177, 1
    %p181 = scmp.eq.s32.totalorder %s17, 1
    %p182 = scmp.ne.s32.totalorder %s177, %s179
    %p183 = scmp.eq.s32.totalorder %s17, 0
    %p184 = por %p182, %p183
    %p185 = scmp.ne.s32.totalorder %s177, %s179
    %p186 = scmp.eq.s32.totalorder %s22, 1
    %p187 = por %p185, %p186
    %p188 = scmp.ne.s32.totalorder %s179, %s180
    %p189 = scmp.eq.s32.totalorder %s22, 0
    %p190 = por %p188, %p189
    %p191 = scmp.ne.s32.totalorder %s179, %s180
    %p192 = scmp.eq.s32.totalorder %s23, 1
    %p193 = por %p191, %p192
    %p195 = scmp.ne.s32.totalorder %s180, %s194
    %p196 = scmp.eq.s32.totalorder %s23, 0
    %p197 = por %p195, %p196
    %s199 = sadd.s32 %s198, 1
    %p202 = scmp.eq.s32.totalorder %s17, 1
    %p203 = scmp.ne.s32.totalorder %s198, %s200
    %p204 = scmp.eq.s32.totalorder %s17, 0
    %p205 = por %p203, %p204
    %p206 = scmp.ne.s32.totalorder %s198, %s200
    %p207 = scmp.eq.s32.totalorder %s22, 1
    %p208 = por %p206, %p207
    %p209 = scmp.ne.s32.totalorder %s200, %s201
    %p210 = scmp.eq.s32.totalorder %s22, 0
    %p211 = por %p209, %p210
    %p212 = scmp.ne.s32.totalorder %s200, %s201
    %p213 = scmp.eq.s32.totalorder %s23, 1
    %p214 = por %p212, %p213
    %p216 = scmp.ne.s32.totalorder %s201, %s215
    %p217 = scmp.eq.s32.totalorder %s23, 0
    %p218 = por %p216, %p217
    %s219 = ssub.s32 %s17, %s24
    %p220 = scmp.eq.s32.totalorder %s219, 0
    %s222 = sadd.s32 %s221, 1
    %s223 = scalar_select %p220, %s221, %s222
    %p226 = pneg %p220
    %p227 = scmp.eq.s32.totalorder %s17, 1
    %p228 = por %p226, %p227
    %p229 = scmp.ne.s32.totalorder %s221, %s224
    %p230 = scmp.eq.s32.totalorder %s17, 0
    %p231 = por %p229, %p230
    %p232 = scmp.ne.s32.totalorder %s221, %s224
    %p233 = scmp.eq.s32.totalorder %s22, 1
    %p234 = por %p232, %p233
    %p235 = scmp.ne.s32.totalorder %s224, %s225
    %p236 = scmp.eq.s32.totalorder %s22, 0
    %p237 = por %p235, %p236
    %p238 = scmp.ne.s32.totalorder %s224, %s225
    %p239 = scmp.eq.s32.totalorder %s23, 1
    %p240 = por %p238, %p239
    %p242 = scmp.ne.s32.totalorder %s225, %s241
    %p243 = scmp.eq.s32.totalorder %s23, 0
    %p244 = por %p242, %p243
    %p245 = scmp.le.s32.totalorder 1, %s17
    %p246 = scmp.lt.s32.totalorder %s17, 3
    %p247 = pnand %p245, %p246
    %p248 = pneg %p247
    // Predicated region
    $region9: #{termination_head.1} parent=5 // pred_check
      _
    $region10: #{termination_head.1} parent=5 // pred_check_branch
      %250 = sbr.rel (%p247) target = $region12
    $region11: #{termination_head.1} parent=5 // pred_region
      %s251 = ssub.s32 %s17, 1
      // Predicated region
      $region13: #{termination_head.1} parent=11 // pred_check
        %p252 = pneg %p64
      $region14: #{termination_head.1} parent=11 // pred_check_branch
        %254 = sbr.rel (%p252) target = $region16
      $region15: #{termination_head.1} parent=11 // pred_region
        _
      $region16: #{termination_head.1} parent=11 // pred_fallthru
        _
      // Predicated region
      $region17: #{termination_head.1} parent=11 // pred_check
        %p255 = pneg %p85
      $region18: #{termination_head.1} parent=11 // pred_check_branch
        %257 = sbr.rel (%p255) target = $region20
      $region19: #{termination_head.1} parent=11 // pred_region
        _
      $region20: #{termination_head.1} parent=11 // pred_fallthru
        _
      // Predicated region
      $region21: #{termination_head.1} parent=11 // pred_check
        %p258 = pneg %p106
      $region22: #{termination_head.1} parent=11 // pred_check_branch
        %260 = sbr.rel (%p258) target = $region24
      $region23: #{termination_head.1} parent=11 // pred_region
        _
      $region24: #{termination_head.1} parent=11 // pred_fallthru
        _
      // Predicated region
      $region25: #{termination_head.1} parent=11 // pred_check
        %p261 = pneg %p127
      $region26: #{termination_head.1} parent=11 // pred_check_branch
        %263 = sbr.rel (%p261) target = $region28
      $region27: #{termination_head.1} parent=11 // pred_region
        _
      $region28: #{termination_head.1} parent=11 // pred_fallthru
        _
      // Predicated region
      $region29: #{termination_head.1} parent=11 // pred_check
        %p264 = pneg %p148
      $region30: #{termination_head.1} parent=11 // pred_check_branch
        %266 = sbr.rel (%p264) target = $region32
      $region31: #{termination_head.1} parent=11 // pred_region
        _
      $region32: #{termination_head.1} parent=11 // pred_fallthru
        _
      // Predicated region
      $region33: #{termination_head.1} parent=11 // pred_check
        %p267 = pneg %p169
      $region34: #{termination_head.1} parent=11 // pred_check_branch
        %269 = sbr.rel (%p267) target = $region36
      $region35: #{termination_head.1} parent=11 // pred_region
        _
      $region36: #{termination_head.1} parent=11 // pred_fallthru
        _
      // Predicated region
      $region37: #{termination_head.1} parent=11 // pred_check
        %p270 = pneg %p190
      $region38: #{termination_head.1} parent=11 // pred_check_branch
        %272 = sbr.rel (%p270) target = $region40
      $region39: #{termination_head.1} parent=11 // pred_region
        _
      $region40: #{termination_head.1} parent=11 // pred_fallthru
        _
      // Predicated region
      $region41: #{termination_head.1} parent=11 // pred_check
        %p273 = pneg %p211
      $region42: #{termination_head.1} parent=11 // pred_check_branch
        %275 = sbr.rel (%p273) target = $region44
      $region43: #{termination_head.1} parent=11 // pred_region
        _
      $region44: #{termination_head.1} parent=11 // pred_fallthru
        _
    $region12: #{termination_head.1} parent=5 // pred_fallthru
      _
    %p276 = scmp.lt.s32.totalorder %s17, 2
    // Predicated region
    $region45: #{termination_head.1} parent=5 // pred_check
      %p277 = pneg %p276
    $region46: #{termination_head.1} parent=5 // pred_check_branch
      %279 = sbr.rel (%p277) target = $region48
    $region47: #{termination_head.1} parent=5 // pred_region
      // Predicated region
      $region49: #{termination_head.1} parent=47 // pred_check
        %p280 = pneg %p37
      $region50: #{termination_head.1} parent=47 // pred_check_branch
        %282 = sbr.rel (%p280) target = $region52
      $region51: #{termination_head.1} parent=47 // pred_region
        %s283 = smul.u32 38, %s17
        %s284 = ssub.s32 75, %s283
        %p285 = scmp.lt.s32.totalorder %s284, 38
        %s286 = scalar_select %p285, %s284, 38
        %s287 = smul.u32 64, %s286
        %p288 = scmp.lt.s32.totalorder %s283, 74
        %s289 = scalar_select %p288, %s283, 74
        %s290 = smul.addr %s289, 4
        %s291 = scalar_lea.vmem %s0, %s290
        %s292 = smul.u32 38, %s17
        %s293 = ssub.s32 75, %s292
        %p294 = scmp.lt.s32.totalorder %s293, 38
        %s295 = scalar_select %p294, %s293, 38
        %s296 = smul.u32 64, %s295
      $region52: #{termination_head.1} parent=47 // pred_fallthru
        _
    $region48: #{termination_head.1} parent=5 // pred_fallthru
      _
    %p297 = scmp.le.s32.totalorder 1, %s17
    %p298 = scmp.lt.s32.totalorder %s17, 3
    %p299 = pnand %p297, %p298
    %p300 = pneg %p299
    // Predicated region
    $region53: #{termination_head.1} parent=5 // pred_check
      _
    $region54: #{termination_head.1} parent=5 // pred_check_branch
      %302 = sbr.rel (%p299) target = $region56
    $region55: #{termination_head.1} parent=5 // pred_region
      %s303 = ssub.s32 %s17, 1
      %s304 = smul.u32 38, %s22
      %s305 = ssub.s32 75, %s304
      %p306 = scmp.lt.s32.totalorder %s305, 38
      %s307 = scalar_select %p306, %s305, 38
      %s308 = smul.u32 64, %s307
      %p309 = scmp.lt.s32.totalorder %s304, 74
      %s310 = scalar_select %p309, %s304, 74
      %s311 = smul.addr %s310, 4
      %s312 = scalar_lea.vmem %s0, %s311
      %p313 = pneg %p43
      %p314 = pneg %p40
      %p315 = pneg %p64
      %p316 = pneg %p61
      %p317 = pneg %p85
      %p318 = pneg %p82
      %p319 = pneg %p106
      %p320 = pneg %p103
      %p321 = pneg %p127
      %p322 = pneg %p124
      %p323 = pneg %p148
      %p324 = pneg %p145
      %p325 = pneg %p169
      %p326 = pneg %p166
      %p327 = pneg %p190
      %p328 = pneg %p187
      %p329 = pneg %p211
      %p330 = pneg %p208
      %p331 = pneg %p237
      %p332 = pneg %p234
      %p333 = scmp.lt.s32.totalorder %s22, 1
      %s334 = scalar_select %p333, %s22, 1
      %s335 = smul.addr %s334, 3
      %s336 = scalar_lea.vmem %s9, %s335
      %s337 = smul.u32 38, %s22
      %s338 = ssub.s32 75, %s337
      %p339 = scmp.lt.s32.totalorder %s338, 38
      %s340 = scalar_select %p339, %s338, 38
      %s341 = smul.u32 64, %s340
      %p342 = scmp.lt.s32.totalorder %s337, 74
      %s343 = scalar_select %p342, %s337, 74
      %s344 = smul.addr %s343, 4
      %s345 = scalar_lea.vmem %s0, %s344
      %s346 = smul.u32 38, %s22
      %s347 = ssub.s32 75, %s346
      %p348 = scmp.lt.s32.totalorder %s347, 38
      %s349 = scalar_select %p348, %s347, 38
      %s350 = smul.u32 64, %s349
      %p351 = scmp.lt.s32.totalorder %s22, 1
      %s352 = scalar_select %p351, %s22, 1
      %s353 = smul.addr %s352, 3
      %s354 = scalar_lea.vmem %s9, %s353
      %v356 = vld [vmem:[%s345] sm:$0xf]
      %v357 = vld [vmem:[%s345 + $0x4] sm:$0xf]
      %v358 = vld [vmem:[%s345 + $0x8] sm:$0xf]
      %v359 = vld [vmem:[%s345 + $0xc] sm:$0xf]
      %v360 = vld [vmem:[%s345 + $0x10] sm:$0xf]
      %v361 = vld [vmem:[%s345 + $0x14] sm:$0xf]
      %v362 = vld [vmem:[%s345 + $0x18] sm:$0xf]
      %v363 = vld [vmem:[%s345 + $0x1c] sm:$0xf]
      %v364 = vld [vmem:[%s345 + $0x20] sm:$0xf]
      %v365 = vld [vmem:[%s345 + $0x24] sm:$0xf]
      %v366 = vld [vmem:[%s345 + $0x28] sm:$0xf]
      %v367 = vld [vmem:[%s345 + $0x2c] sm:$0xf]
      %v368 = vld [vmem:[%s345 + $0x30] sm:$0xf]
      %v369 = vld [vmem:[%s345 + $0x34] sm:$0xf]
      %v370 = vld [vmem:[%s345 + $0x38] sm:$0xf]
      %v371 = vld [vmem:[%s345 + $0x3c] sm:$0xf]
      %v372 = vld [vmem:[%s345 + $0x40] sm:$0xf]
      %v373 = vld [vmem:[%s345 + $0x44] sm:$0xf]
      %v374 = vld [vmem:[%s345 + $0x48] sm:$0xf]
      %v375 = vld [vmem:[%s345 + $0x4c] sm:$0xf]
      %v376 = vld [vmem:[%s345 + $0x50] sm:$0xf]
      %v377 = vld [vmem:[%s345 + $0x54] sm:$0xf]
      %v378 = vld [vmem:[%s345 + $0x58] sm:$0xf]
      %v379 = vld [vmem:[%s345 + $0x5c] sm:$0xf]
      %v380 = vld [vmem:[%s345 + $0x60] sm:$0xf]
      %v381 = vld [vmem:[%s345 + $0x64] sm:$0xf]
      %v382 = vld [vmem:[%s345 + $0x68] sm:$0xf]
      %v383 = vld [vmem:[%s345 + $0x6c] sm:$0xf]
      %v384 = vld [vmem:[%s345 + $0x70] sm:$0xf]
      %v385 = vld [vmem:[%s345 + $0x74] sm:$0xf]
      %v386 = vld [vmem:[%s345 + $0x78] sm:$0xf]
      %v387 = vld [vmem:[%s345 + $0x7c] sm:$0xf]
      %v388 = vld [vmem:[%s345 + $0x80] sm:$0xf]
      %v389 = vld [vmem:[%s345 + $0x84] sm:$0xf]
      %v390 = vld [vmem:[%s345 + $0x88] sm:$0xf]
      %v391 = vld [vmem:[%s345 + $0x8c] sm:$0xf]
      %v392 = vld [vmem:[%s345 + $0x90] sm:$0xf]
      %v393 = vld [vmem:[%s345 + $0x94] sm:$0xf]
      %v394 = vld [vmem:[%s1] sm:$0xf]
      %v395 = vld [vmem:[%s1 + $0x4] sm:$0xf]
      %v396 = vld [vmem:[%s1 + $0x8] sm:$0xf]
      %v397 = vld [vmem:[%s1 + $0xc] sm:$0xf]
      %v398 = vld [vmem:[%s2] sm:$0x1]
      %v400 = vlaneseq
      %v401 = vshrl.u32 %v400, 7
      %v402 = vsub.s32 0, %v401
      %v403 = vrot.slane %v398, %v402
      %v443 = vunpack.c.l.b16 %v356
      %v444 = vunpack.c.l.b16 %v357
      %v445 = vunpack.c.l.b16 %v358
      %v446 = vunpack.c.l.b16 %v359
      %v447 = vunpack.c.l.b16 %v360
      %v448 = vunpack.c.l.b16 %v361
      %v449 = vunpack.c.l.b16 %v362
      %v450 = vunpack.c.l.b16 %v363
      %v451 = vunpack.c.l.b16 %v364
      %v452 = vunpack.c.l.b16 %v365
      %v453 = vunpack.c.l.b16 %v366
      %v454 = vunpack.c.l.b16 %v367
      %v455 = vunpack.c.l.b16 %v368
      %v456 = vunpack.c.l.b16 %v369
      %v457 = vunpack.c.l.b16 %v370
      %v458 = vunpack.c.l.b16 %v371
      %v459 = vunpack.c.l.b16 %v372
      %v460 = vunpack.c.l.b16 %v373
      %v461 = vunpack.c.l.b16 %v374
      %v462 = vunpack.c.l.b16 %v375
      %v463 = vunpack.c.l.b16 %v376
      %v464 = vunpack.c.l.b16 %v377
      %v465 = vunpack.c.l.b16 %v378
      %v466 = vunpack.c.l.b16 %v379
      %v467 = vunpack.c.l.b16 %v380
      %v468 = vunpack.c.l.b16 %v381
      %v469 = vunpack.c.l.b16 %v382
      %v470 = vunpack.c.l.b16 %v383
      %v471 = vunpack.c.l.b16 %v384
      %v472 = vunpack.c.l.b16 %v385
      %v473 = vunpack.c.l.b16 %v386
      %v474 = vunpack.c.l.b16 %v387
      %v475 = vunpack.c.l.b16 %v388
      %v476 = vunpack.c.l.b16 %v389
      %v477 = vunpack.c.l.b16 %v390
      %v478 = vunpack.c.l.b16 %v391
      %v479 = vunpack.c.l.b16 %v392
      %v480 = vunpack.c.l.b16 %v393
      %v481 = vpack.c.b16 %v444, %v443
      %v482 = vpack.c.b16 %v446, %v445
      %v483 = vpack.c.b16 %v448, %v447
      %v484 = vpack.c.b16 %v450, %v449
      %v485 = vpack.c.b16 %v452, %v451
      %v486 = vpack.c.b16 %v454, %v453
      %v487 = vpack.c.b16 %v456, %v455
      %v488 = vpack.c.b16 %v458, %v457
      %v489 = vpack.c.b16 %v460, %v459
      %v490 = vpack.c.b16 %v462, %v461
      %v491 = vpack.c.b16 %v464, %v463
      %v492 = vpack.c.b16 %v466, %v465
      %v493 = vpack.c.b16 %v468, %v467
      %v494 = vpack.c.b16 %v470, %v469
      %v495 = vpack.c.b16 %v472, %v471
      %v496 = vpack.c.b16 %v474, %v473
      %v497 = vpack.c.b16 %v476, %v475
      %v498 = vpack.c.b16 %v478, %v477
      %v499 = vpack.c.b16 %v480, %v479
      %v504 = vunpack.c.l.b16 %v394
      %v505 = vunpack.c.l.b16 %v395
      %v506 = vunpack.c.l.b16 %v396
      %v507 = vunpack.c.l.b16 %v397
      %v508 = vpack.c.b16 %v505, %v504
      %v509 = vpack.c.b16 %v507, %v506
      %vm512 = vcmask 261120
      %v514 = vsel %vm512, %v481, 0
      %v517 = vsel %vm512, %v482, 0
      %v520 = vsel %vm512, %v483, 0
      %v523 = vsel %vm512, %v484, 0
      %v526 = vsel %vm512, %v485, 0
      %v529 = vsel %vm512, %v486, 0
      %v532 = vsel %vm512, %v487, 0
      %v535 = vsel %vm512, %v488, 0
      %v538 = vsel %vm512, %v489, 0
      %v541 = vsel %vm512, %v490, 0
      %v544 = vsel %vm512, %v491, 0
      %v547 = vsel %vm512, %v492, 0
      %v550 = vsel %vm512, %v493, 0
      %v553 = vsel %vm512, %v494, 0
      %v556 = vsel %vm512, %v495, 0
      %v559 = vsel %vm512, %v496, 0
      %v562 = vsel %vm512, %v497, 0
      %v565 = vsel %vm512, %v498, 0
      %v568 = vsel %vm512, %v499, 0
      %570 = vmatprep.subr.bf16.mxu0 0
      %571 = vmatpush1.bf16.msra.mxu0 %v508
      %572 = vmatprep.subr.bf16.mxu0 0
      %573 = vmatpush1.bf16.msra.mxu0 %v509
      %574 = vmatprep.subr.bf16.mxu0 0
      %575 = vmatpush1.bf16.msra.mxu0 0
      %576 = vmatprep.subr.bf16.mxu0 0
      %577 = vmatpush1.bf16.msra.mxu0 0
      %578 = vmatprep.subr.bf16.mxu0 0
      %579 = vmatpush1.bf16.msra.mxu0 0
      %580 = vmatprep.subr.bf16.mxu0 0
      %581 = vmatpush1.bf16.msra.mxu0 0
      %582 = vmatprep.subr.bf16.mxu0 0
      %583 = vmatpush1.bf16.msra.mxu0 0
      %584 = vmatprep.subr.bf16.mxu0 0
      %585 = vmatpush1.bf16.msra.mxu0 0
      %586 = vmatprep.subr.bf16.mxu0 0
      %587 = vmatpush1.bf16.msra.mxu0 0
      %588 = vmatprep.subr.bf16.mxu0 0
      %589 = vmatpush1.bf16.msra.mxu0 0
      %590 = vmatprep.subr.bf16.mxu0 0
      %591 = vmatpush1.bf16.msra.mxu0 0
      %592 = vmatprep.subr.bf16.mxu0 0
      %593 = vmatpush1.bf16.msra.mxu0 0
      %594 = vmatprep.subr.bf16.mxu0 0
      %595 = vmatpush1.bf16.msra.mxu0 0
      %596 = vmatprep.subr.bf16.mxu0 0
      %597 = vmatpush1.bf16.msra.mxu0 0
      %598 = vmatprep.subr.bf16.mxu0 0
      %599 = vmatpush1.bf16.msra.mxu0 0
      %600 = vmatprep.subr.bf16.mxu0 0
      %601 = vmatpush1.bf16.msra.mxu0 0
      %602 = vmatprep.mubr.bf16.mxu0 0
      %603 = vmatmul.mubr.bf16.gmra.mrb[0].mxu0 %v514
      %v604 = vpop.f32.mrb[0].mxu0
      %v605 = vadd.f32 %v403, %v604
      %v606 = vpop.f32.mrb[0].mxu0
      %v607 = vpop.f32.mrb[0].mxu0
      %v608 = vadd.f32 %v403, %v607
      %v609 = vpop.f32.mrb[0].mxu0
      %610 = vmatprep.mubr.bf16.mxu0 0
      %611 = vmatmul.mubr.bf16.gmra.mrb[0].mxu0 %v517
      %v612 = vpop.f32.mrb[0].mxu0
      %v613 = vadd.f32 %v403, %v612
      %v614 = vpop.f32.mrb[0].mxu0
      %v615 = vpop.f32.mrb[0].mxu0
      %v616 = vadd.f32 %v403, %v615
      %v617 = vpop.f32.mrb[0].mxu0
      %618 = vmatprep.mubr.bf16.mxu0 0
      %619 = vmatmul.mubr.bf16.gmra.mrb[0].mxu0 %v520
      %v620 = vpop.f32.mrb[0].mxu0
      %v621 = vadd.f32 %v403, %v620
      %v622 = vpop.f32.mrb[0].mxu0
      %v623 = vpop.f32.mrb[0].mxu0
      %v624 = vadd.f32 %v403, %v623
      %v625 = vpop.f32.mrb[0].mxu0
      %626 = vmatprep.mubr.bf16.mxu0 0
      %627 = vmatmul.mubr.bf16.gmra.mrb[0].mxu0 %v523
      %v628 = vpop.f32.mrb[0].mxu0
      %v629 = vadd.f32 %v403, %v628
      %v630 = vpop.f32.mrb[0].mxu0
      %v631 = vpop.f32.mrb[0].mxu0
      %v632 = vadd.f32 %v403, %v631
      %v633 = vpop.f32.mrb[0].mxu0
      %634 = vmatprep.mubr.bf16.mxu0 0
      %635 = vmatmul.mubr.bf16.gmra.mrb[0].mxu0 %v526
      %v636 = vpop.f32.mrb[0].mxu0
      %v637 = vadd.f32 %v403, %v636
      %v638 = vpop.f32.mrb[0].mxu0
      %v639 = vpop.f32.mrb[0].mxu0
      %v640 = vadd.f32 %v403, %v639
      %v641 = vpop.f32.mrb[0].mxu0
      %642 = vmatprep.mubr.bf16.mxu0 0
      %643 = vmatmul.mubr.bf16.gmra.mrb[0].mxu0 %v529
      %v644 = vpop.f32.mrb[0].mxu0
      %v645 = vadd.f32 %v403, %v644
      %v646 = vpop.f32.mrb[0].mxu0
      %v647 = vpop.f32.mrb[0].mxu0
      %v648 = vadd.f32 %v403, %v647
      %v649 = vpop.f32.mrb[0].mxu0
      %650 = vmatprep.mubr.bf16.mxu0 0
      %651 = vmatmul.mubr.bf16.gmra.mrb[0].mxu0 %v532
      %v652 = vpop.f32.mrb[0].mxu0
      %v653 = vadd.f32 %v403, %v652
      %v654 = vpop.f32.mrb[0].mxu0
      %v655 = vpop.f32.mrb[0].mxu0
      %v656 = vadd.f32 %v403, %v655
      %v657 = vpop.f32.mrb[0].mxu0
      %658 = vmatprep.mubr.bf16.mxu0 0
      %659 = vmatmul.mubr.bf16.gmra.mrb[0].mxu0 %v535
      %v660 = vpop.f32.mrb[0].mxu0
      %v661 = vadd.f32 %v403, %v660
      %v662 = vpop.f32.mrb[0].mxu0
      %v663 = vpop.f32.mrb[0].mxu0
      %v664 = vadd.f32 %v403, %v663
      %v665 = vpop.f32.mrb[0].mxu0
      %666 = vmatprep.mubr.bf16.mxu0 0
      %667 = vmatmul.mubr.bf16.gmra.mrb[0].mxu0 %v538
      %v668 = vpop.f32.mrb[0].mxu0
      %v669 = vadd.f32 %v403, %v668
      %v670 = vpop.f32.mrb[0].mxu0
      %v671 = vpop.f32.mrb[0].mxu0
      %v672 = vadd.f32 %v403, %v671
      %v673 = vpop.f32.mrb[0].mxu0
      %674 = vmatprep.mubr.bf16.mxu0 0
      %675 = vmatmul.mubr.bf16.gmra.mrb[0].mxu0 %v541
      %v676 = vpop.f32.mrb[0].mxu0
      %v677 = vadd.f32 %v403, %v676
      %v678 = vpop.f32.mrb[0].mxu0
      %v679 = vpop.f32.mrb[0].mxu0
      %v680 = vadd.f32 %v403, %v679
      %v681 = vpop.f32.mrb[0].mxu0
      %682 = vmatprep.mubr.bf16.mxu0 0
      %683 = vmatmul.mubr.bf16.gmra.mrb[0].mxu0 %v544
      %v684 = vpop.f32.mrb[0].mxu0
      %v685 = vadd.f32 %v403, %v684
      %v686 = vpop.f32.mrb[0].mxu0
      %v687 = vpop.f32.mrb[0].mxu0
      %v688 = vadd.f32 %v403, %v687
      %v689 = vpop.f32.mrb[0].mxu0
      %690 = vmatprep.mubr.bf16.mxu0 0
      %691 = vmatmul.mubr.bf16.gmra.mrb[0].mxu0 %v547
      %v692 = vpop.f32.mrb[0].mxu0
      %v693 = vadd.f32 %v403, %v692
      %v694 = vpop.f32.mrb[0].mxu0
      %v695 = vpop.f32.mrb[0].mxu0
      %v696 = vadd.f32 %v403, %v695
      %v697 = vpop.f32.mrb[0].mxu0
      %698 = vmatprep.mubr.bf16.mxu0 0
      %699 = vmatmul.mubr.bf16.gmra.mrb[0].mxu0 %v550
      %v700 = vpop.f32.mrb[0].mxu0
      %v701 = vadd.f32 %v403, %v700
      %v702 = vpop.f32.mrb[0].mxu0
      %v703 = vpop.f32.mrb[0].mxu0
      %v704 = vadd.f32 %v403, %v703
      %v705 = vpop.f32.mrb[0].mxu0
      %706 = vmatprep.mubr.bf16.mxu0 0
      %707 = vmatmul.mubr.bf16.gmra.mrb[0].mxu0 %v553
      %v708 = vpop.f32.mrb[0].mxu0
      %v709 = vadd.f32 %v403, %v708
      %v710 = vpop.f32.mrb[0].mxu0
      %v711 = vpop.f32.mrb[0].mxu0
      %v712 = vadd.f32 %v403, %v711
      %v713 = vpop.f32.mrb[0].mxu0
      %714 = vmatprep.mubr.bf16.mxu0 0
      %715 = vmatmul.mubr.bf16.gmra.mrb[0].mxu0 %v556
      %v716 = vpop.f32.mrb[0].mxu0
      %v717 = vadd.f32 %v403, %v716
      %v718 = vpop.f32.mrb[0].mxu0
      %v719 = vpop.f32.mrb[0].mxu0
      %v720 = vadd.f32 %v403, %v719
      %v721 = vpop.f32.mrb[0].mxu0
      %722 = vmatprep.mubr.bf16.mxu0 0
      %723 = vmatmul.mubr.bf16.gmra.mrb[0].mxu0 %v559
      %v724 = vpop.f32.mrb[0].mxu0
      %v725 = vadd.f32 %v403, %v724
      %v726 = vpop.f32.mrb[0].mxu0
      %v727 = vpop.f32.mrb[0].mxu0
      %v728 = vadd.f32 %v403, %v727
      %v729 = vpop.f32.mrb[0].mxu0
      %730 = vmatprep.mubr.bf16.mxu0 0
      %731 = vmatmul.mubr.bf16.gmra.mrb[0].mxu0 %v562
      %v732 = vpop.f32.mrb[0].mxu0
      %v733 = vadd.f32 %v403, %v732
      %v734 = vpop.f32.mrb[0].mxu0
      %v735 = vpop.f32.mrb[0].mxu0
      %v736 = vadd.f32 %v403, %v735
      %v737 = vpop.f32.mrb[0].mxu0
      %738 = vmatprep.mubr.bf16.mxu0 0
      %739 = vmatmul.mubr.bf16.gmra.mrb[0].mxu0 %v565
      %v740 = vpop.f32.mrb[0].mxu0
      %v741 = vadd.f32 %v403, %v740
      %v742 = vpop.f32.mrb[0].mxu0
      %v743 = vpop.f32.mrb[0].mxu0
      %v744 = vadd.f32 %v403, %v743
      %v745 = vpop.f32.mrb[0].mxu0
      %746 = vmatprep.mubr.bf16.mxu0 0
      %747 = vmatmul.mubr.bf16.gmra.mrb[0].mxu0 %v568
      %v748 = vpop.f32.mrb[0].mxu0
      %v749 = vadd.f32 %v403, %v748
      %v750 = vpop.f32.mrb[0].mxu0
      %v751 = vpop.f32.mrb[0].mxu0
      %v752 = vadd.f32 %v403, %v751
      %v753 = vpop.f32.mrb[0].mxu0
      %754 = vdwg.mxu0
      %v755 = vmul.f32 %v605, %v605
      %v756 = vmul.f32 %v608, %v608
      %v757 = vmul.f32 %v613, %v613
      %v758 = vmul.f32 %v616, %v616
      %v759 = vmul.f32 %v621, %v621
      %v760 = vmul.f32 %v624, %v624
      %v761 = vmul.f32 %v629, %v629
      %v762 = vmul.f32 %v632, %v632
      %v763 = vmul.f32 %v637, %v637
      %v764 = vmul.f32 %v640, %v640
      %v765 = vmul.f32 %v645, %v645
      %v766 = vmul.f32 %v648, %v648
      %v767 = vmul.f32 %v653, %v653
      %v768 = vmul.f32 %v656, %v656
      %v769 = vmul.f32 %v661, %v661
      %v770 = vmul.f32 %v664, %v664
      %v771 = vmul.f32 %v669, %v669
      %v772 = vmul.f32 %v672, %v672
      %v773 = vmul.f32 %v677, %v677
      %v774 = vmul.f32 %v680, %v680
      %v775 = vmul.f32 %v685, %v685
      %v776 = vmul.f32 %v688, %v688
      %v777 = vmul.f32 %v693, %v693
      %v778 = vmul.f32 %v696, %v696
      %v779 = vmul.f32 %v701, %v701
      %v780 = vmul.f32 %v704, %v704
      %v781 = vmul.f32 %v709, %v709
      %v782 = vmul.f32 %v712, %v712
      %v783 = vmul.f32 %v717, %v717
      %v784 = vmul.f32 %v720, %v720
      %v785 = vmul.f32 %v725, %v725
      %v786 = vmul.f32 %v728, %v728
      %v787 = vmul.f32 %v733, %v733
      %v788 = vmul.f32 %v736, %v736
      %v789 = vmul.f32 %v741, %v741
      %v790 = vmul.f32 %v744, %v744
      %v791 = vmul.f32 %v749, %v749
      %v792 = vmul.f32 %v752, %v752
      %v793 = vsel %vm512, %v755, 0.0
      %794 = vadd.xlane.f32.xlu0 %v793
      %v795 = vpop.xlane.xlu0 %794
      %v796 = vsel %vm512, %v756, 0.0
      %797 = vadd.xlane.f32.xlu0 %v796
      %v798 = vpop.xlane.xlu0 %797
      %v799 = vsel %vm512, %v757, 0.0
      %800 = vadd.xlane.f32.xlu0 %v799
      %v801 = vpop.xlane.xlu0 %800
      %v802 = vsel %vm512, %v758, 0.0
      %803 = vadd.xlane.f32.xlu0 %v802
      %v804 = vpop.xlane.xlu0 %803
      %v805 = vsel %vm512, %v759, 0.0
      %806 = vadd.xlane.f32.xlu0 %v805
      %v807 = vpop.xlane.xlu0 %806
      %v808 = vsel %vm512, %v760, 0.0
      %809 = vadd.xlane.f32.xlu0 %v808
      %v810 = vpop.xlane.xlu0 %809
      %v811 = vsel %vm512, %v761, 0.0
      %812 = vadd.xlane.f32.xlu0 %v811
      %v813 = vpop.xlane.xlu0 %812
      %v814 = vsel %vm512, %v762, 0.0
      %815 = vadd.xlane.f32.xlu0 %v814
      %v816 = vpop.xlane.xlu0 %815
      %v817 = vsel %vm512, %v763, 0.0
      %818 = vadd.xlane.f32.xlu0 %v817
      %v819 = vpop.xlane.xlu0 %818
      %v820 = vsel %vm512, %v764, 0.0
      %821 = vadd.xlane.f32.xlu0 %v820
      %v822 = vpop.xlane.xlu0 %821
      %v823 = vsel %vm512, %v765, 0.0
      %824 = vadd.xlane.f32.xlu0 %v823
      %v825 = vpop.xlane.xlu0 %824
      %v826 = vsel %vm512, %v766, 0.0
      %827 = vadd.xlane.f32.xlu0 %v826
      %v828 = vpop.xlane.xlu0 %827
      %v829 = vsel %vm512, %v767, 0.0
      %830 = vadd.xlane.f32.xlu0 %v829
      %v831 = vpop.xlane.xlu0 %830
      %v832 = vsel %vm512, %v768, 0.0
      %833 = vadd.xlane.f32.xlu0 %v832
      %v834 = vpop.xlane.xlu0 %833
      %v835 = vsel %vm512, %v769, 0.0
      %836 = vadd.xlane.f32.xlu0 %v835
      %v837 = vpop.xlane.xlu0 %836
      %v838 = vsel %vm512, %v770, 0.0
      %839 = vadd.xlane.f32.xlu0 %v838
      %v840 = vpop.xlane.xlu0 %839
      %v841 = vsel %vm512, %v771, 0.0
      %842 = vadd.xlane.f32.xlu0 %v841
      %v843 = vpop.xlane.xlu0 %842
      %v844 = vsel %vm512, %v772, 0.0
      %845 = vadd.xlane.f32.xlu0 %v844
      %v846 = vpop.xlane.xlu0 %845
      %v847 = vsel %vm512, %v773, 0.0
      %848 = vadd.xlane.f32.xlu0 %v847
      %v849 = vpop.xlane.xlu0 %848
      %v850 = vsel %vm512, %v774, 0.0
      %851 = vadd.xlane.f32.xlu0 %v850
      %v852 = vpop.xlane.xlu0 %851
      %v853 = vsel %vm512, %v775, 0.0
      %854 = vadd.xlane.f32.xlu0 %v853
      %v855 = vpop.xlane.xlu0 %854
      %v856 = vsel %vm512, %v776, 0.0
      %857 = vadd.xlane.f32.xlu0 %v856
      %v858 = vpop.xlane.xlu0 %857
      %v859 = vsel %vm512, %v777, 0.0
      %860 = vadd.xlane.f32.xlu0 %v859
      %v861 = vpop.xlane.xlu0 %860
      %v862 = vsel %vm512, %v778, 0.0
      %863 = vadd.xlane.f32.xlu0 %v862
      %v864 = vpop.xlane.xlu0 %863
      %v865 = vsel %vm512, %v779, 0.0
      %866 = vadd.xlane.f32.xlu0 %v865
      %v867 = vpop.xlane.xlu0 %866
      %v868 = vsel %vm512, %v780, 0.0
      %869 = vadd.xlane.f32.xlu0 %v868
      %v870 = vpop.xlane.xlu0 %869
      %v871 = vsel %vm512, %v781, 0.0
      %872 = vadd.xlane.f32.xlu0 %v871
      %v873 = vpop.xlane.xlu0 %872
      %v874 = vsel %vm512, %v782, 0.0
      %875 = vadd.xlane.f32.xlu0 %v874
      %v876 = vpop.xlane.xlu0 %875
      %v877 = vsel %vm512, %v783, 0.0
      %878 = vadd.xlane.f32.xlu0 %v877
      %v879 = vpop.xlane.xlu0 %878
      %v880 = vsel %vm512, %v784, 0.0
      %881 = vadd.xlane.f32.xlu0 %v880
      %v882 = vpop.xlane.xlu0 %881
      %v883 = vsel %vm512, %v785, 0.0
      %884 = vadd.xlane.f32.xlu0 %v883
      %v885 = vpop.xlane.xlu0 %884
      %v886 = vsel %vm512, %v786, 0.0
      %887 = vadd.xlane.f32.xlu0 %v886
      %v888 = vpop.xlane.xlu0 %887
      %v889 = vsel %vm512, %v787, 0.0
      %890 = vadd.xlane.f32.xlu0 %v889
      %v891 = vpop.xlane.xlu0 %890
      %v892 = vsel %vm512, %v788, 0.0
      %893 = vadd.xlane.f32.xlu0 %v892
      %v894 = vpop.xlane.xlu0 %893
      %v895 = vsel %vm512, %v789, 0.0
      %896 = vadd.xlane.f32.xlu0 %v895
      %v897 = vpop.xlane.xlu0 %896
      %v898 = vsel %vm512, %v790, 0.0
      %899 = vadd.xlane.f32.xlu0 %v898
      %v900 = vpop.xlane.xlu0 %899
      %v901 = vsel %vm512, %v791, 0.0
      %902 = vadd.xlane.f32.xlu0 %v901
      %v903 = vpop.xlane.xlu0 %902
      %v904 = vsel %vm512, %v792, 0.0
      %905 = vadd.xlane.f32.xlu0 %v904
      %v906 = vpop.xlane.xlu0 %905
      %v907 = vrcp.pop 32.0
      %v908 = vmul.f32 %v795, %v907
      %v909 = vmul.f32 %v798, %v907
      %v910 = vmul.f32 %v801, %v907
      %v911 = vmul.f32 %v804, %v907
      %v912 = vmul.f32 %v807, %v907
      %v913 = vmul.f32 %v810, %v907
      %v914 = vmul.f32 %v813, %v907
      %v915 = vmul.f32 %v816, %v907
      %v916 = vmul.f32 %v819, %v907
      %v917 = vmul.f32 %v822, %v907
      %v918 = vmul.f32 %v825, %v907
      %v919 = vmul.f32 %v828, %v907
      %v920 = vmul.f32 %v831, %v907
      %v921 = vmul.f32 %v834, %v907
      %v922 = vmul.f32 %v837, %v907
      %v923 = vmul.f32 %v840, %v907
      %v924 = vmul.f32 %v843, %v907
      %v925 = vmul.f32 %v846, %v907
      %v926 = vmul.f32 %v849, %v907
      %v927 = vmul.f32 %v852, %v907
      %v928 = vmul.f32 %v855, %v907
      %v929 = vmul.f32 %v858, %v907
      %v930 = vmul.f32 %v861, %v907
      %v931 = vmul.f32 %v864, %v907
      %v932 = vmul.f32 %v867, %v907
      %v933 = vmul.f32 %v870, %v907
      %v934 = vmul.f32 %v873, %v907
      %v935 = vmul.f32 %v876, %v907
      %v936 = vmul.f32 %v879, %v907
      %v937 = vmul.f32 %v882, %v907
      %v938 = vmul.f32 %v885, %v907
      %v939 = vmul.f32 %v888, %v907
      %v940 = vmul.f32 %v891, %v907
      %v941 = vmul.f32 %v894, %v907
      %v942 = vmul.f32 %v897, %v907
      %v943 = vmul.f32 %v900, %v907
      %v944 = vmul.f32 %v903, %v907
      %v945 = vmul.f32 %v906, %v907
      %v946 = vadd.f32 %v908, 1e-06
      %v947 = vadd.f32 %v909, 1e-06
      %v948 = vadd.f32 %v910, 1e-06
      %v949 = vadd.f32 %v911, 1e-06
      %v950 = vadd.f32 %v912, 1e-06
      %v951 = vadd.f32 %v913, 1e-06
      %v952 = vadd.f32 %v914, 1e-06
      %v953 = vadd.f32 %v915, 1e-06
      %v954 = vadd.f32 %v916, 1e-06
      %v955 = vadd.f32 %v917, 1e-06
      %v956 = vadd.f32 %v918, 1e-06
      %v957 = vadd.f32 %v919, 1e-06
      %v958 = vadd.f32 %v920, 1e-06
      %v959 = vadd.f32 %v921, 1e-06
      %v960 = vadd.f32 %v922, 1e-06
      %v961 = vadd.f32 %v923, 1e-06
      %v962 = vadd.f32 %v924, 1e-06
      %v963 = vadd.f32 %v925, 1e-06
      %v964 = vadd.f32 %v926, 1e-06
      %v965 = vadd.f32 %v927, 1e-06
      %v966 = vadd.f32 %v928, 1e-06
      %v967 = vadd.f32 %v929, 1e-06
      %v968 = vadd.f32 %v930, 1e-06
      %v969 = vadd.f32 %v931, 1e-06
      %v970 = vadd.f32 %v932, 1e-06
      %v971 = vadd.f32 %v933, 1e-06
      %v972 = vadd.f32 %v934, 1e-06
      %v973 = vadd.f32 %v935, 1e-06
      %v974 = vadd.f32 %v936, 1e-06
      %v975 = vadd.f32 %v937, 1e-06
      %v976 = vadd.f32 %v938, 1e-06
      %v977 = vadd.f32 %v939, 1e-06
      %v978 = vadd.f32 %v940, 1e-06
      %v979 = vadd.f32 %v941, 1e-06
      %v980 = vadd.f32 %v942, 1e-06
      %v981 = vadd.f32 %v943, 1e-06
      %v982 = vadd.f32 %v944, 1e-06
      %v983 = vadd.f32 %v945, 1e-06
      %v984 = vrsqrt.pop %v946
      %v985 = vrsqrt.pop %v947
      %v986 = vrsqrt.pop %v948
      %v987 = vrsqrt.pop %v949
      %v988 = vrsqrt.pop %v950
      %v989 = vrsqrt.pop %v951
      %v990 = vrsqrt.pop %v952
      %v991 = vrsqrt.pop %v953
      %v992 = vrsqrt.pop %v954
      %v993 = vrsqrt.pop %v955
      %v994 = vrsqrt.pop %v956
      %v995 = vrsqrt.pop %v957
      %v996 = vrsqrt.pop %v958
      %v997 = vrsqrt.pop %v959
      %v998 = vrsqrt.pop %v960
      %v999 = vrsqrt.pop %v961
      %v1000 = vrsqrt.pop %v962
      %v1001 = vrsqrt.pop %v963
      %v1002 = vrsqrt.pop %v964
      %v1003 = vrsqrt.pop %v965
      %v1004 = vrsqrt.pop %v966
      %v1005 = vrsqrt.pop %v967
      %v1006 = vrsqrt.pop %v968
      %v1007 = vrsqrt.pop %v969
      %v1008 = vrsqrt.pop %v970
      %v1009 = vrsqrt.pop %v971
      %v1010 = vrsqrt.pop %v972
      %v1011 = vrsqrt.pop %v973
      %v1012 = vrsqrt.pop %v974
      %v1013 = vrsqrt.pop %v975
      %v1014 = vrsqrt.pop %v976
      %v1015 = vrsqrt.pop %v977
      %v1016 = vrsqrt.pop %v978
      %v1017 = vrsqrt.pop %v979
      %v1018 = vrsqrt.pop %v980
      %v1019 = vrsqrt.pop %v981
      %v1020 = vrsqrt.pop %v982
      %v1021 = vrsqrt.pop %v983
      %v1022 = vmul.f32 %v605, %v984
      %v1023 = vmul.f32 %v608, %v985
      %v1024 = vmul.f32 %v613, %v986
      %v1025 = vmul.f32 %v616, %v987
      %v1026 = vmul.f32 %v621, %v988
      %v1027 = vmul.f32 %v624, %v989
      %v1028 = vmul.f32 %v629, %v990
      %v1029 = vmul.f32 %v632, %v991
      %v1030 = vmul.f32 %v637, %v992
      %v1031 = vmul.f32 %v640, %v993
      %v1032 = vmul.f32 %v645, %v994
      %v1033 = vmul.f32 %v648, %v995
      %v1034 = vmul.f32 %v653, %v996
      %v1035 = vmul.f32 %v656, %v997
      %v1036 = vmul.f32 %v661, %v998
      %v1037 = vmul.f32 %v664, %v999
      %v1038 = vmul.f32 %v669, %v1000
      %v1039 = vmul.f32 %v672, %v1001
      %v1040 = vmul.f32 %v677, %v1002
      %v1041 = vmul.f32 %v680, %v1003
      %v1042 = vmul.f32 %v685, %v1004
      %v1043 = vmul.f32 %v688, %v1005
      %v1044 = vmul.f32 %v693, %v1006
      %v1045 = vmul.f32 %v696, %v1007
      %v1046 = vmul.f32 %v701, %v1008
      %v1047 = vmul.f32 %v704, %v1009
      %v1048 = vmul.f32 %v709, %v1010
      %v1049 = vmul.f32 %v712, %v1011
      %v1050 = vmul.f32 %v717, %v1012
      %v1051 = vmul.f32 %v720, %v1013
      %v1052 = vmul.f32 %v725, %v1014
      %v1053 = vmul.f32 %v728, %v1015
      %v1054 = vmul.f32 %v733, %v1016
      %v1055 = vmul.f32 %v736, %v1017
      %v1056 = vmul.f32 %v741, %v1018
      %v1057 = vmul.f32 %v744, %v1019
      %v1058 = vmul.f32 %v749, %v1020
      %v1059 = vmul.f32 %v752, %v1021
      %v1060 = vld [vmem:[%s3] sm:$0x1]
      %v1062 = vlaneseq
      %v1063 = vshrl.u32 %v1062, 7
      %v1064 = vsub.s32 0, %v1063
      %v1065 = vrot.slane %v1060, %v1064
      %v1067 = vmul.f32 %v1022, %v1065
      %v1068 = vmul.f32 %v1023, %v1065
      %v1069 = vmul.f32 %v1024, %v1065
      %v1070 = vmul.f32 %v1025, %v1065
      %v1071 = vmul.f32 %v1026, %v1065
      %v1072 = vmul.f32 %v1027, %v1065
      %v1073 = vmul.f32 %v1028, %v1065
      %v1074 = vmul.f32 %v1029, %v1065
      %v1075 = vmul.f32 %v1030, %v1065
      %v1076 = vmul.f32 %v1031, %v1065
      %v1077 = vmul.f32 %v1032, %v1065
      %v1078 = vmul.f32 %v1033, %v1065
      %v1079 = vmul.f32 %v1034, %v1065
      %v1080 = vmul.f32 %v1035, %v1065
      %v1081 = vmul.f32 %v1036, %v1065
      %v1082 = vmul.f32 %v1037, %v1065
      %v1083 = vmul.f32 %v1038, %v1065
      %v1084 = vmul.f32 %v1039, %v1065
      %v1085 = vmul.f32 %v1040, %v1065
      %v1086 = vmul.f32 %v1041, %v1065
      %v1087 = vmul.f32 %v1042, %v1065
      %v1088 = vmul.f32 %v1043, %v1065
      %v1089 = vmul.f32 %v1044, %v1065
      %v1090 = vmul.f32 %v1045, %v1065
      %v1091 = vmul.f32 %v1046, %v1065
      %v1092 = vmul.f32 %v1047, %v1065
      %v1093 = vmul.f32 %v1048, %v1065
      %v1094 = vmul.f32 %v1049, %v1065
      %v1095 = vmul.f32 %v1050, %v1065
      %v1096 = vmul.f32 %v1051, %v1065
      %v1097 = vmul.f32 %v1052, %v1065
      %v1098 = vmul.f32 %v1053, %v1065
      %v1099 = vmul.f32 %v1054, %v1065
      %v1100 = vmul.f32 %v1055, %v1065
      %v1101 = vmul.f32 %v1056, %v1065
      %v1102 = vmul.f32 %v1057, %v1065
      %v1103 = vmul.f32 %v1058, %v1065
      %v1104 = vmul.f32 %v1059, %v1065
      %v1105 = vxor.u32 %v1067, 2147483648
      %v1106 = vxor.u32 %v1068, 2147483648
      %v1107 = vxor.u32 %v1069, 2147483648
      %v1108 = vxor.u32 %v1070, 2147483648
      %v1109 = vxor.u32 %v1071, 2147483648
      %v1110 = vxor.u32 %v1072, 2147483648
      %v1111 = vxor.u32 %v1073, 2147483648
      %v1112 = vxor.u32 %v1074, 2147483648
      %v1113 = vxor.u32 %v1075, 2147483648
      %v1114 = vxor.u32 %v1076, 2147483648
      %v1115 = vxor.u32 %v1077, 2147483648
      %v1116 = vxor.u32 %v1078, 2147483648
      %v1117 = vxor.u32 %v1079, 2147483648
      %v1118 = vxor.u32 %v1080, 2147483648
      %v1119 = vxor.u32 %v1081, 2147483648
      %v1120 = vxor.u32 %v1082, 2147483648
      %v1121 = vxor.u32 %v1083, 2147483648
      %v1122 = vxor.u32 %v1084, 2147483648
      %v1123 = vxor.u32 %v1085, 2147483648
      %v1124 = vxor.u32 %v1086, 2147483648
      %v1125 = vxor.u32 %v1087, 2147483648
      %v1126 = vxor.u32 %v1088, 2147483648
      %v1127 = vxor.u32 %v1089, 2147483648
      %v1128 = vxor.u32 %v1090, 2147483648
      %v1129 = vxor.u32 %v1091, 2147483648
      %v1130 = vxor.u32 %v1092, 2147483648
      %v1131 = vxor.u32 %v1093, 2147483648
      %v1132 = vxor.u32 %v1094, 2147483648
      %v1133 = vxor.u32 %v1095, 2147483648
      %v1134 = vxor.u32 %v1096, 2147483648
      %v1135 = vxor.u32 %v1097, 2147483648
      %v1136 = vxor.u32 %v1098, 2147483648
      %v1137 = vxor.u32 %v1099, 2147483648
      %v1138 = vxor.u32 %v1100, 2147483648
      %v1139 = vxor.u32 %v1101, 2147483648
      %v1140 = vxor.u32 %v1102, 2147483648
      %v1141 = vxor.u32 %v1103, 2147483648
      %v1142 = vxor.u32 %v1104, 2147483648
      %v1143 = vmul.f32 %v1105, 1.442695
      %v1144 = vpow.pop %v1143
      %v1145 = vmul.f32 %v1106, 1.442695
      %v1146 = vpow.pop %v1145
      %v1147 = vmul.f32 %v1107, 1.442695
      %v1148 = vpow.pop %v1147
      %v1149 = vmul.f32 %v1108, 1.442695
      %v1150 = vpow.pop %v1149
      %v1151 = vmul.f32 %v1109, 1.442695
      %v1152 = vpow.pop %v1151
      %v1153 = vmul.f32 %v1110, 1.442695
      %v1154 = vpow.pop %v1153
      %v1155 = vmul.f32 %v1111, 1.442695
      %v1156 = vpow.pop %v1155
      %v1157 = vmul.f32 %v1112, 1.442695
      %v1158 = vpow.pop %v1157
      %v1159 = vmul.f32 %v1113, 1.442695
      %v1160 = vpow.pop %v1159
      %v1161 = vmul.f32 %v1114, 1.442695
      %v1162 = vpow.pop %v1161
      %v1163 = vmul.f32 %v1115, 1.442695
      %v1164 = vpow.pop %v1163
      %v1165 = vmul.f32 %v1116, 1.442695
      %v1166 = vpow.pop %v1165
      %v1167 = vmul.f32 %v1117, 1.442695
      %v1168 = vpow.pop %v1167
      %v1169 = vmul.f32 %v1118, 1.442695
      %v1170 = vpow.pop %v1169
      %v1171 = vmul.f32 %v1119, 1.442695
      %v1172 = vpow.pop %v1171
      %v1173 = vmul.f32 %v1120, 1.442695
      %v1174 = vpow.pop %v1173
      %v1175 = vmul.f32 %v1121, 1.442695
      %v1176 = vpow.pop %v1175
      %v1177 = vmul.f32 %v1122, 1.442695
      %v1178 = vpow.pop %v1177
      %v1179 = vmul.f32 %v1123, 1.442695
      %v1180 = vpow.pop %v1179
      %v1181 = vmul.f32 %v1124, 1.442695
      %v1182 = vpow.pop %v1181
      %v1183 = vmul.f32 %v1125, 1.442695
      %v1184 = vpow.pop %v1183
      %v1185 = vmul.f32 %v1126, 1.442695
      %v1186 = vpow.pop %v1185
      %v1187 = vmul.f32 %v1127, 1.442695
      %v1188 = vpow.pop %v1187
      %v1189 = vmul.f32 %v1128, 1.442695
      %v1190 = vpow.pop %v1189
      %v1191 = vmul.f32 %v1129, 1.442695
      %v1192 = vpow.pop %v1191
      %v1193 = vmul.f32 %v1130, 1.442695
      %v1194 = vpow.pop %v1193
      %v1195 = vmul.f32 %v1131, 1.442695
      %v1196 = vpow.pop %v1195
      %v1197 = vmul.f32 %v1132, 1.442695
      %v1198 = vpow.pop %v1197
      %v1199 = vmul.f32 %v1133, 1.442695
      %v1200 = vpow.pop %v1199
      %v1201 = vmul.f32 %v1134, 1.442695
      %v1202 = vpow.pop %v1201
      %v1203 = vmul.f32 %v1135, 1.442695
      %v1204 = vpow.pop %v1203
      %v1205 = vmul.f32 %v1136, 1.442695
      %v1206 = vpow.pop %v1205
      %v1207 = vmul.f32 %v1137, 1.442695
      %v1208 = vpow.pop %v1207
      %v1209 = vmul.f32 %v1138, 1.442695
      %v1210 = vpow.pop %v1209
      %v1211 = vmul.f32 %v1139, 1.442695
      %v1212 = vpow.pop %v1211
      %v1213 = vmul.f32 %v1140, 1.442695
      %v1214 = vpow.pop %v1213
      %v1215 = vmul.f32 %v1141, 1.442695
      %v1216 = vpow.pop %v1215
      %v1217 = vmul.f32 %v1142, 1.442695
      %v1218 = vpow.pop %v1217
      %v1219 = vadd.f32 %v1144, 1.0
      %v1220 = vadd.f32 %v1146, 1.0
      %v1221 = vadd.f32 %v1148, 1.0
      %v1222 = vadd.f32 %v1150, 1.0
      %v1223 = vadd.f32 %v1152, 1.0
      %v1224 = vadd.f32 %v1154, 1.0
      %v1225 = vadd.f32 %v1156, 1.0
      %v1226 = vadd.f32 %v1158, 1.0
      %v1227 = vadd.f32 %v1160, 1.0
      %v1228 = vadd.f32 %v1162, 1.0
      %v1229 = vadd.f32 %v1164, 1.0
      %v1230 = vadd.f32 %v1166, 1.0
      %v1231 = vadd.f32 %v1168, 1.0
      %v1232 = vadd.f32 %v1170, 1.0
      %v1233 = vadd.f32 %v1172, 1.0
      %v1234 = vadd.f32 %v1174, 1.0
      %v1235 = vadd.f32 %v1176, 1.0
      %v1236 = vadd.f32 %v1178, 1.0
      %v1237 = vadd.f32 %v1180, 1.0
      %v1238 = vadd.f32 %v1182, 1.0
      %v1239 = vadd.f32 %v1184, 1.0
      %v1240 = vadd.f32 %v1186, 1.0
      %v1241 = vadd.f32 %v1188, 1.0
      %v1242 = vadd.f32 %v1190, 1.0
      %v1243 = vadd.f32 %v1192, 1.0
      %v1244 = vadd.f32 %v1194, 1.0
      %v1245 = vadd.f32 %v1196, 1.0
      %v1246 = vadd.f32 %v1198, 1.0
      %v1247 = vadd.f32 %v1200, 1.0
      %v1248 = vadd.f32 %v1202, 1.0
      %v1249 = vadd.f32 %v1204, 1.0
      %v1250 = vadd.f32 %v1206, 1.0
      %v1251 = vadd.f32 %v1208, 1.0
      %v1252 = vadd.f32 %v1210, 1.0
      %v1253 = vadd.f32 %v1212, 1.0
      %v1254 = vadd.f32 %v1214, 1.0
      %v1255 = vadd.f32 %v1216, 1.0
      %v1256 = vadd.f32 %v1218, 1.0
      %v1257 = vrcp.pop %v1219
      %v1258 = vmul.f32 1.0, %v1257
      %v1259 = vrcp.pop %v1220
      %v1260 = vmul.f32 1.0, %v1259
      %v1261 = vrcp.pop %v1221
      %v1262 = vmul.f32 1.0, %v1261
      %v1263 = vrcp.pop %v1222
      %v1264 = vmul.f32 1.0, %v1263
      %v1265 = vrcp.pop %v1223
      %v1266 = vmul.f32 1.0, %v1265
      %v1267 = vrcp.pop %v1224
      %v1268 = vmul.f32 1.0, %v1267
      %v1269 = vrcp.pop %v1225
      %v1270 = vmul.f32 1.0, %v1269
      %v1271 = vrcp.pop %v1226
      %v1272 = vmul.f32 1.0, %v1271
      %v1273 = vrcp.pop %v1227
      %v1274 = vmul.f32 1.0, %v1273
      %v1275 = vrcp.pop %v1228
      %v1276 = vmul.f32 1.0, %v1275
      %v1277 = vrcp.pop %v1229
      %v1278 = vmul.f32 1.0, %v1277
      %v1279 = vrcp.pop %v1230
      %v1280 = vmul.f32 1.0, %v1279
      %v1281 = vrcp.pop %v1231
      %v1282 = vmul.f32 1.0, %v1281
      %v1283 = vrcp.pop %v1232
      %v1284 = vmul.f32 1.0, %v1283
      %v1285 = vrcp.pop %v1233
      %v1286 = vmul.f32 1.0, %v1285
      %v1287 = vrcp.pop %v1234
      %v1288 = vmul.f32 1.0, %v1287
      %v1289 = vrcp.pop %v1235
      %v1290 = vmul.f32 1.0, %v1289
      %v1291 = vrcp.pop %v1236
      %v1292 = vmul.f32 1.0, %v1291
      %v1293 = vrcp.pop %v1237
      %v1294 = vmul.f32 1.0, %v1293
      %v1295 = vrcp.pop %v1238
      %v1296 = vmul.f32 1.0, %v1295
      %v1297 = vrcp.pop %v1239
      %v1298 = vmul.f32 1.0, %v1297
      %v1299 = vrcp.pop %v1240
      %v1300 = vmul.f32 1.0, %v1299
      %v1301 = vrcp.pop %v1241
      %v1302 = vmul.f32 1.0, %v1301
      %v1303 = vrcp.pop %v1242
      %v1304 = vmul.f32 1.0, %v1303
      %v1305 = vrcp.pop %v1243
      %v1306 = vmul.f32 1.0, %v1305
      %v1307 = vrcp.pop %v1244
      %v1308 = vmul.f32 1.0, %v1307
      %v1309 = vrcp.pop %v1245
      %v1310 = vmul.f32 1.0, %v1309
      %v1311 = vrcp.pop %v1246
      %v1312 = vmul.f32 1.0, %v1311
      %v1313 = vrcp.pop %v1247
      %v1314 = vmul.f32 1.0, %v1313
      %v1315 = vrcp.pop %v1248
      %v1316 = vmul.f32 1.0, %v1315
      %v1317 = vrcp.pop %v1249
      %v1318 = vmul.f32 1.0, %v1317
      %v1319 = vrcp.pop %v1250
      %v1320 = vmul.f32 1.0, %v1319
      %v1321 = vrcp.pop %v1251
      %v1322 = vmul.f32 1.0, %v1321
      %v1323 = vrcp.pop %v1252
      %v1324 = vmul.f32 1.0, %v1323
      %v1325 = vrcp.pop %v1253
      %v1326 = vmul.f32 1.0, %v1325
      %v1327 = vrcp.pop %v1254
      %v1328 = vmul.f32 1.0, %v1327
      %v1329 = vrcp.pop %v1255
      %v1330 = vmul.f32 1.0, %v1329
      %v1331 = vrcp.pop %v1256
      %v1332 = vmul.f32 1.0, %v1331
      %v1333 = vmul.f32 %v1067, %v1258
      %v1334 = vmul.f32 %v1068, %v1260
      %v1335 = vmul.f32 %v1069, %v1262
      %v1336 = vmul.f32 %v1070, %v1264
      %v1337 = vmul.f32 %v1071, %v1266
      %v1338 = vmul.f32 %v1072, %v1268
      %v1339 = vmul.f32 %v1073, %v1270
      %v1340 = vmul.f32 %v1074, %v1272
      %v1341 = vmul.f32 %v1075, %v1274
      %v1342 = vmul.f32 %v1076, %v1276
      %v1343 = vmul.f32 %v1077, %v1278
      %v1344 = vmul.f32 %v1078, %v1280
      %v1345 = vmul.f32 %v1079, %v1282
      %v1346 = vmul.f32 %v1080, %v1284
      %v1347 = vmul.f32 %v1081, %v1286
      %v1348 = vmul.f32 %v1082, %v1288
      %v1349 = vmul.f32 %v1083, %v1290
      %v1350 = vmul.f32 %v1084, %v1292
      %v1351 = vmul.f32 %v1085, %v1294
      %v1352 = vmul.f32 %v1086, %v1296
      %v1353 = vmul.f32 %v1087, %v1298
      %v1354 = vmul.f32 %v1088, %v1300
      %v1355 = vmul.f32 %v1089, %v1302
      %v1356 = vmul.f32 %v1090, %v1304
      %v1357 = vmul.f32 %v1091, %v1306
      %v1358 = vmul.f32 %v1092, %v1308
      %v1359 = vmul.f32 %v1093, %v1310
      %v1360 = vmul.f32 %v1094, %v1312
      %v1361 = vmul.f32 %v1095, %v1314
      %v1362 = vmul.f32 %v1096, %v1316
      %v1363 = vmul.f32 %v1097, %v1318
      %v1364 = vmul.f32 %v1098, %v1320
      %v1365 = vmul.f32 %v1099, %v1322
      %v1366 = vmul.f32 %v1100, %v1324
      %v1367 = vmul.f32 %v1101, %v1326
      %v1368 = vmul.f32 %v1102, %v1328
      %v1369 = vmul.f32 %v1103, %v1330
      %v1370 = vmul.f32 %v1104, %v1332
      %v1371 = vpack.c.bf16 %v1334, %v1333
      %v1372 = vpack.c.bf16 %v1336, %v1335
      %v1373 = vpack.c.bf16 %v1338, %v1337
      %v1374 = vpack.c.bf16 %v1340, %v1339
      %v1375 = vpack.c.bf16 %v1342, %v1341
      %v1376 = vpack.c.bf16 %v1344, %v1343
      %v1377 = vpack.c.bf16 %v1346, %v1345
      %v1378 = vpack.c.bf16 %v1348, %v1347
      %v1379 = vpack.c.bf16 %v1350, %v1349
      %v1380 = vpack.c.bf16 %v1352, %v1351
      %v1381 = vpack.c.bf16 %v1354, %v1353
      %v1382 = vpack.c.bf16 %v1356, %v1355
      %v1383 = vpack.c.bf16 %v1358, %v1357
      %v1384 = vpack.c.bf16 %v1360, %v1359
      %v1385 = vpack.c.bf16 %v1362, %v1361
      %v1386 = vpack.c.bf16 %v1364, %v1363
      %v1387 = vpack.c.bf16 %v1366, %v1365
      %v1388 = vpack.c.bf16 %v1368, %v1367
      %v1389 = vpack.c.bf16 %v1370, %v1369
      %v1390 = vld [vmem:[%s4] sm:$0xf]
      %v1391 = vld [vmem:[%s4 + $0x4] sm:$0xf]
      %v1392 = vld [vmem:[%s4 + $0x8] sm:$0xf]
      %v1393 = vld [vmem:[%s4 + $0xc] sm:$0xf]
      %v1394 = vld [vmem:[%s5] sm:$0x1]
      %v1396 = vlaneseq
      %v1397 = vshrl.u32 %v1396, 7
      %v1398 = vsub.s32 0, %v1397
      %v1399 = vrot.slane %v1394, %v1398
      %v1405 = vunpack.c.l.b16 %v1390
      %v1406 = vunpack.c.l.b16 %v1391
      %v1407 = vunpack.c.l.b16 %v1392
      %v1408 = vunpack.c.l.b16 %v1393
      %v1409 = vpack.c.b16 %v1406, %v1405
      %v1410 = vpack.c.b16 %v1408, %v1407
      %v1414 = vsel %vm512, %v1371, 0
      %v1417 = vsel %vm512, %v1372, 0
      %v1420 = vsel %vm512, %v1373, 0
      %v1423 = vsel %vm512, %v1374, 0
      %v1426 = vsel %vm512, %v1375, 0
      %v1429 = vsel %vm512, %v1376, 0
      %v1432 = vsel %vm512, %v1377, 0
      %v1435 = vsel %vm512, %v1378, 0
      %v1438 = vsel %vm512, %v1379, 0
      %v1441 = vsel %vm512, %v1380, 0
      %v1444 = vsel %vm512, %v1381, 0
      %v1447 = vsel %vm512, %v1382, 0
      %v1450 = vsel %vm512, %v1383, 0
      %v1453 = vsel %vm512, %v1384, 0
      %v1456 = vsel %vm512, %v1385, 0
      %v1459 = vsel %vm512, %v1386, 0
      %v1462 = vsel %vm512, %v1387, 0
      %v1465 = vsel %vm512, %v1388, 0
      %v1468 = vsel %vm512, %v1389, 0
      %1470 = vmatprep.subr.bf16.mxu0 0
      %1471 = vmatpush1.bf16.msra.mxu0 %v1409
      %1472 = vmatprep.subr.bf16.mxu0 0
      %1473 = vmatpush1.bf16.msra.mxu0 %v1410
      %1474 = vmatprep.subr.bf16.mxu0 0
      %1475 = vmatpush1.bf16.msra.mxu0 0
      %1476 = vmatprep.subr.bf16.mxu0 0
      %1477 = vmatpush1.bf16.msra.mxu0 0
      %1478 = vmatprep.subr.bf16.mxu0 0
      %1479 = vmatpush1.bf16.msra.mxu0 0
      %1480 = vmatprep.subr.bf16.mxu0 0
      %1481 = vmatpush1.bf16.msra.mxu0 0
      %1482 = vmatprep.subr.bf16.mxu0 0
      %1483 = vmatpush1.bf16.msra.mxu0 0
      %1484 = vmatprep.subr.bf16.mxu0 0
      %1485 = vmatpush1.bf16.msra.mxu0 0
      %1486 = vmatprep.subr.bf16.mxu0 0
      %1487 = vmatpush1.bf16.msra.mxu0 0
      %1488 = vmatprep.subr.bf16.mxu0 0
      %1489 = vmatpush1.bf16.msra.mxu0 0
      %1490 = vmatprep.subr.bf16.mxu0 0
      %1491 = vmatpush1.bf16.msra.mxu0 0
      %1492 = vmatprep.subr.bf16.mxu0 0
      %1493 = vmatpush1.bf16.msra.mxu0 0
      %1494 = vmatprep.subr.bf16.mxu0 0
      %1495 = vmatpush1.bf16.msra.mxu0 0
      %1496 = vmatprep.subr.bf16.mxu0 0
      %1497 = vmatpush1.bf16.msra.mxu0 0
      %1498 = vmatprep.subr.bf16.mxu0 0
      %1499 = vmatpush1.bf16.msra.mxu0 0
      %1500 = vmatprep.subr.bf16.mxu0 0
      %1501 = vmatpush1.bf16.msra.mxu0 0
      %1502 = vmatprep.mubr.bf16.mxu0 0
      %1503 = vmatmul.mubr.bf16.gmra.mrb[0].mxu0 %v1414
      %v1504 = vpop.f32.mrb[0].mxu0
      %v1505 = vadd.f32 %v1399, %v1504
      %v1506 = vpop.f32.mrb[0].mxu0
      %v1507 = vpop.f32.mrb[0].mxu0
      %v1508 = vadd.f32 %v1399, %v1507
      %v1509 = vpop.f32.mrb[0].mxu0
      %1510 = vmatprep.mubr.bf16.mxu0 0
      %1511 = vmatmul.mubr.bf16.gmra.mrb[0].mxu0 %v1417
      %v1512 = vpop.f32.mrb[0].mxu0
      %v1513 = vadd.f32 %v1399, %v1512
      %v1514 = vpop.f32.mrb[0].mxu0
      %v1515 = vpop.f32.mrb[0].mxu0
      %v1516 = vadd.f32 %v1399, %v1515
      %v1517 = vpop.f32.mrb[0].mxu0
      %1518 = vmatprep.mubr.bf16.mxu0 0
      %1519 = vmatmul.mubr.bf16.gmra.mrb[0].mxu0 %v1420
      %v1520 = vpop.f32.mrb[0].mxu0
      %v1521 = vadd.f32 %v1399, %v1520
      %v1522 = vpop.f32.mrb[0].mxu0
      %v1523 = vpop.f32.mrb[0].mxu0
      %v1524 = vadd.f32 %v1399, %v1523
      %v1525 = vpop.f32.mrb[0].mxu0
      %1526 = vmatprep.mubr.bf16.mxu0 0
      %1527 = vmatmul.mubr.bf16.gmra.mrb[0].mxu0 %v1423
      %v1528 = vpop.f32.mrb[0].mxu0
      %v1529 = vadd.f32 %v1399, %v1528
      %v1530 = vpop.f32.mrb[0].mxu0
      %v1531 = vpop.f32.mrb[0].mxu0
      %v1532 = vadd.f32 %v1399, %v1531
      %v1533 = vpop.f32.mrb[0].mxu0
      %1534 = vmatprep.mubr.bf16.mxu0 0
      %1535 = vmatmul.mubr.bf16.gmra.mrb[0].mxu0 %v1426
      %v1536 = vpop.f32.mrb[0].mxu0
      %v1537 = vadd.f32 %v1399, %v1536
      %v1538 = vpop.f32.mrb[0].mxu0
      %v1539 = vpop.f32.mrb[0].mxu0
      %v1540 = vadd.f32 %v1399, %v1539
      %v1541 = vpop.f32.mrb[0].mxu0
      %1542 = vmatprep.mubr.bf16.mxu0 0
      %1543 = vmatmul.mubr.bf16.gmra.mrb[0].mxu0 %v1429
      %v1544 = vpop.f32.mrb[0].mxu0
      %v1545 = vadd.f32 %v1399, %v1544
      %v1546 = vpop.f32.mrb[0].mxu0
      %v1547 = vpop.f32.mrb[0].mxu0
      %v1548 = vadd.f32 %v1399, %v1547
      %v1549 = vpop.f32.mrb[0].mxu0
      %1550 = vmatprep.mubr.bf16.mxu0 0
      %1551 = vmatmul.mubr.bf16.gmra.mrb[0].mxu0 %v1432
      %v1552 = vpop.f32.mrb[0].mxu0
      %v1553 = vadd.f32 %v1399, %v1552
      %v1554 = vpop.f32.mrb[0].mxu0
      %v1555 = vpop.f32.mrb[0].mxu0
      %v1556 = vadd.f32 %v1399, %v1555
      %v1557 = vpop.f32.mrb[0].mxu0
      %1558 = vmatprep.mubr.bf16.mxu0 0
      %1559 = vmatmul.mubr.bf16.gmra.mrb[0].mxu0 %v1435
      %v1560 = vpop.f32.mrb[0].mxu0
      %v1561 = vadd.f32 %v1399, %v1560
      %v1562 = vpop.f32.mrb[0].mxu0
      %v1563 = vpop.f32.mrb[0].mxu0
      %v1564 = vadd.f32 %v1399, %v1563
      %v1565 = vpop.f32.mrb[0].mxu0
      %1566 = vmatprep.mubr.bf16.mxu0 0
      %1567 = vmatmul.mubr.bf16.gmra.mrb[0].mxu0 %v1438
      %v1568 = vpop.f32.mrb[0].mxu0
      %v1569 = vadd.f32 %v1399, %v1568
      %v1570 = vpop.f32.mrb[0].mxu0
      %v1571 = vpop.f32.mrb[0].mxu0
      %v1572 = vadd.f32 %v1399, %v1571
      %v1573 = vpop.f32.mrb[0].mxu0
      %1574 = vmatprep.mubr.bf16.mxu0 0
      %1575 = vmatmul.mubr.bf16.gmra.mrb[0].mxu0 %v1441
      %v1576 = vpop.f32.mrb[0].mxu0
      %v1577 = vadd.f32 %v1399, %v1576
      %v1578 = vpop.f32.mrb[0].mxu0
      %v1579 = vpop.f32.mrb[0].mxu0
      %v1580 = vadd.f32 %v1399, %v1579
      %v1581 = vpop.f32.mrb[0].mxu0
      %1582 = vmatprep.mubr.bf16.mxu0 0
      %1583 = vmatmul.mubr.bf16.gmra.mrb[0].mxu0 %v1444
      %v1584 = vpop.f32.mrb[0].mxu0
      %v1585 = vadd.f32 %v1399, %v1584
      %v1586 = vpop.f32.mrb[0].mxu0
      %v1587 = vpop.f32.mrb[0].mxu0
      %v1588 = vadd.f32 %v1399, %v1587
      %v1589 = vpop.f32.mrb[0].mxu0
      %1590 = vmatprep.mubr.bf16.mxu0 0
      %1591 = vmatmul.mubr.bf16.gmra.mrb[0].mxu0 %v1447
      %v1592 = vpop.f32.mrb[0].mxu0
      %v1593 = vadd.f32 %v1399, %v1592
      %v1594 = vpop.f32.mrb[0].mxu0
      %v1595 = vpop.f32.mrb[0].mxu0
      %v1596 = vadd.f32 %v1399, %v1595
      %v1597 = vpop.f32.mrb[0].mxu0
      %1598 = vmatprep.mubr.bf16.mxu0 0
      %1599 = vmatmul.mubr.bf16.gmra.mrb[0].mxu0 %v1450
      %v1600 = vpop.f32.mrb[0].mxu0
      %v1601 = vadd.f32 %v1399, %v1600
      %v1602 = vpop.f32.mrb[0].mxu0
      %v1603 = vpop.f32.mrb[0].mxu0
      %v1604 = vadd.f32 %v1399, %v1603
      %v1605 = vpop.f32.mrb[0].mxu0
      %1606 = vmatprep.mubr.bf16.mxu0 0
      %1607 = vmatmul.mubr.bf16.gmra.mrb[0].mxu0 %v1453
      %v1608 = vpop.f32.mrb[0].mxu0
      %v1609 = vadd.f32 %v1399, %v1608
      %v1610 = vpop.f32.mrb[0].mxu0
      %v1611 = vpop.f32.mrb[0].mxu0
      %v1612 = vadd.f32 %v1399, %v1611
      %v1613 = vpop.f32.mrb[0].mxu0
      %1614 = vmatprep.mubr.bf16.mxu0 0
      %1615 = vmatmul.mubr.bf16.gmra.mrb[0].mxu0 %v1456
      %v1616 = vpop.f32.mrb[0].mxu0
      %v1617 = vadd.f32 %v1399, %v1616
      %v1618 = vpop.f32.mrb[0].mxu0
      %v1619 = vpop.f32.mrb[0].mxu0
      %v1620 = vadd.f32 %v1399, %v1619
      %v1621 = vpop.f32.mrb[0].mxu0
      %1622 = vmatprep.mubr.bf16.mxu0 0
      %1623 = vmatmul.mubr.bf16.gmra.mrb[0].mxu0 %v1459
      %v1624 = vpop.f32.mrb[0].mxu0
      %v1625 = vadd.f32 %v1399, %v1624
      %v1626 = vpop.f32.mrb[0].mxu0
      %v1627 = vpop.f32.mrb[0].mxu0
      %v1628 = vadd.f32 %v1399, %v1627
      %v1629 = vpop.f32.mrb[0].mxu0
      %1630 = vmatprep.mubr.bf16.mxu0 0
      %1631 = vmatmul.mubr.bf16.gmra.mrb[0].mxu0 %v1462
      %v1632 = vpop.f32.mrb[0].mxu0
      %v1633 = vadd.f32 %v1399, %v1632
      %v1634 = vpop.f32.mrb[0].mxu0
      %v1635 = vpop.f32.mrb[0].mxu0
      %v1636 = vadd.f32 %v1399, %v1635
      %v1637 = vpop.f32.mrb[0].mxu0
      %1638 = vmatprep.mubr.bf16.mxu0 0
      %1639 = vmatmul.mubr.bf16.gmra.mrb[0].mxu0 %v1465
      %v1640 = vpop.f32.mrb[0].mxu0
      %v1641 = vadd.f32 %v1399, %v1640
      %v1642 = vpop.f32.mrb[0].mxu0
      %v1643 = vpop.f32.mrb[0].mxu0
      %v1644 = vadd.f32 %v1399, %v1643
      %v1645 = vpop.f32.mrb[0].mxu0
      %1646 = vmatprep.mubr.bf16.mxu0 0
      %1647 = vmatmul.mubr.bf16.gmra.mrb[0].mxu0 %v1468
      %v1648 = vpop.f32.mrb[0].mxu0
      %v1649 = vadd.f32 %v1399, %v1648
      %v1650 = vpop.f32.mrb[0].mxu0
      %v1651 = vpop.f32.mrb[0].mxu0
      %v1652 = vadd.f32 %v1399, %v1651
      %v1653 = vpop.f32.mrb[0].mxu0
      %1654 = vdwg.mxu0
      %v1655 = vmul.f32 %v1505, %v1505
      %v1656 = vmul.f32 %v1508, %v1508
      %v1657 = vmul.f32 %v1513, %v1513
      %v1658 = vmul.f32 %v1516, %v1516
      %v1659 = vmul.f32 %v1521, %v1521
      %v1660 = vmul.f32 %v1524, %v1524
      %v1661 = vmul.f32 %v1529, %v1529
      %v1662 = vmul.f32 %v1532, %v1532
      %v1663 = vmul.f32 %v1537, %v1537
      %v1664 = vmul.f32 %v1540, %v1540
      %v1665 = vmul.f32 %v1545, %v1545
      %v1666 = vmul.f32 %v1548, %v1548
      %v1667 = vmul.f32 %v1553, %v1553
      %v1668 = vmul.f32 %v1556, %v1556
      %v1669 = vmul.f32 %v1561, %v1561
      %v1670 = vmul.f32 %v1564, %v1564
      %v1671 = vmul.f32 %v1569, %v1569
      %v1672 = vmul.f32 %v1572, %v1572
      %v1673 = vmul.f32 %v1577, %v1577
      %v1674 = vmul.f32 %v1580, %v1580
      %v1675 = vmul.f32 %v1585, %v1585
      %v1676 = vmul.f32 %v1588, %v1588
      %v1677 = vmul.f32 %v1593, %v1593
      %v1678 = vmul.f32 %v1596, %v1596
      %v1679 = vmul.f32 %v1601, %v1601
      %v1680 = vmul.f32 %v1604, %v1604
      %v1681 = vmul.f32 %v1609, %v1609
      %v1682 = vmul.f32 %v1612, %v1612
      %v1683 = vmul.f32 %v1617, %v1617
      %v1684 = vmul.f32 %v1620, %v1620
      %v1685 = vmul.f32 %v1625, %v1625
      %v1686 = vmul.f32 %v1628, %v1628
      %v1687 = vmul.f32 %v1633, %v1633
      %v1688 = vmul.f32 %v1636, %v1636
      %v1689 = vmul.f32 %v1641, %v1641
      %v1690 = vmul.f32 %v1644, %v1644
      %v1691 = vmul.f32 %v1649, %v1649
      %v1692 = vmul.f32 %v1652, %v1652
      %v1693 = vsel %vm512, %v1655, 0.0
      %1694 = vadd.xlane.f32.xlu0 %v1693
      %v1695 = vpop.xlane.xlu0 %1694
      %v1696 = vsel %vm512, %v1656, 0.0
      %1697 = vadd.xlane.f32.xlu0 %v1696
      %v1698 = vpop.xlane.xlu0 %1697
      %v1699 = vsel %vm512, %v1657, 0.0
      %1700 = vadd.xlane.f32.xlu0 %v1699
      %v1701 = vpop.xlane.xlu0 %1700
      %v1702 = vsel %vm512, %v1658, 0.0
      %1703 = vadd.xlane.f32.xlu0 %v1702
      %v1704 = vpop.xlane.xlu0 %1703
      %v1705 = vsel %vm512, %v1659, 0.0
      %1706 = vadd.xlane.f32.xlu0 %v1705
      %v1707 = vpop.xlane.xlu0 %1706
      %v1708 = vsel %vm512, %v1660, 0.0
      %1709 = vadd.xlane.f32.xlu0 %v1708
      %v1710 = vpop.xlane.xlu0 %1709
      %v1711 = vsel %vm512, %v1661, 0.0
      %1712 = vadd.xlane.f32.xlu0 %v1711
      %v1713 = vpop.xlane.xlu0 %1712
      %v1714 = vsel %vm512, %v1662, 0.0
      %1715 = vadd.xlane.f32.xlu0 %v1714
      %v1716 = vpop.xlane.xlu0 %1715
      %v1717 = vsel %vm512, %v1663, 0.0
      %1718 = vadd.xlane.f32.xlu0 %v1717
      %v1719 = vpop.xlane.xlu0 %1718
      %v1720 = vsel %vm512, %v1664, 0.0
      %1721 = vadd.xlane.f32.xlu0 %v1720
      %v1722 = vpop.xlane.xlu0 %1721
      %v1723 = vsel %vm512, %v1665, 0.0
      %1724 = vadd.xlane.f32.xlu0 %v1723
      %v1725 = vpop.xlane.xlu0 %1724
      %v1726 = vsel %vm512, %v1666, 0.0
      %1727 = vadd.xlane.f32.xlu0 %v1726
      %v1728 = vpop.xlane.xlu0 %1727
      %v1729 = vsel %vm512, %v1667, 0.0
      %1730 = vadd.xlane.f32.xlu0 %v1729
      %v1731 = vpop.xlane.xlu0 %1730
      %v1732 = vsel %vm512, %v1668, 0.0
      %1733 = vadd.xlane.f32.xlu0 %v1732
      %v1734 = vpop.xlane.xlu0 %1733
      %v1735 = vsel %vm512, %v1669, 0.0
      %1736 = vadd.xlane.f32.xlu0 %v1735
      %v1737 = vpop.xlane.xlu0 %1736
      %v1738 = vsel %vm512, %v1670, 0.0
      %1739 = vadd.xlane.f32.xlu0 %v1738
      %v1740 = vpop.xlane.xlu0 %1739
      %v1741 = vsel %vm512, %v1671, 0.0
      %1742 = vadd.xlane.f32.xlu0 %v1741
      %v1743 = vpop.xlane.xlu0 %1742
      %v1744 = vsel %vm512, %v1672, 0.0
      %1745 = vadd.xlane.f32.xlu0 %v1744
      %v1746 = vpop.xlane.xlu0 %1745
      %v1747 = vsel %vm512, %v1673, 0.0
      %1748 = vadd.xlane.f32.xlu0 %v1747
      %v1749 = vpop.xlane.xlu0 %1748
      %v1750 = vsel %vm512, %v1674, 0.0
      %1751 = vadd.xlane.f32.xlu0 %v1750
      %v1752 = vpop.xlane.xlu0 %1751
      %v1753 = vsel %vm512, %v1675, 0.0
      %1754 = vadd.xlane.f32.xlu0 %v1753
      %v1755 = vpop.xlane.xlu0 %1754
      %v1756 = vsel %vm512, %v1676, 0.0
      %1757 = vadd.xlane.f32.xlu0 %v1756
      %v1758 = vpop.xlane.xlu0 %1757
      %v1759 = vsel %vm512, %v1677, 0.0
      %1760 = vadd.xlane.f32.xlu0 %v1759
      %v1761 = vpop.xlane.xlu0 %1760
      %v1762 = vsel %vm512, %v1678, 0.0
      %1763 = vadd.xlane.f32.xlu0 %v1762
      %v1764 = vpop.xlane.xlu0 %1763
      %v1765 = vsel %vm512, %v1679, 0.0
      %1766 = vadd.xlane.f32.xlu0 %v1765
      %v1767 = vpop.xlane.xlu0 %1766
      %v1768 = vsel %vm512, %v1680, 0.0
      %1769 = vadd.xlane.f32.xlu0 %v1768
      %v1770 = vpop.xlane.xlu0 %1769
      %v1771 = vsel %vm512, %v1681, 0.0
      %1772 = vadd.xlane.f32.xlu0 %v1771
      %v1773 = vpop.xlane.xlu0 %1772
      %v1774 = vsel %vm512, %v1682, 0.0
      %1775 = vadd.xlane.f32.xlu0 %v1774
      %v1776 = vpop.xlane.xlu0 %1775
      %v1777 = vsel %vm512, %v1683, 0.0
      %1778 = vadd.xlane.f32.xlu0 %v1777
      %v1779 = vpop.xlane.xlu0 %1778
      %v1780 = vsel %vm512, %v1684, 0.0
      %1781 = vadd.xlane.f32.xlu0 %v1780
      %v1782 = vpop.xlane.xlu0 %1781
      %v1783 = vsel %vm512, %v1685, 0.0
      %1784 = vadd.xlane.f32.xlu0 %v1783
      %v1785 = vpop.xlane.xlu0 %1784
      %v1786 = vsel %vm512, %v1686, 0.0
      %1787 = vadd.xlane.f32.xlu0 %v1786
      %v1788 = vpop.xlane.xlu0 %1787
      %v1789 = vsel %vm512, %v1687, 0.0
      %1790 = vadd.xlane.f32.xlu0 %v1789
      %v1791 = vpop.xlane.xlu0 %1790
      %v1792 = vsel %vm512, %v1688, 0.0
      %1793 = vadd.xlane.f32.xlu0 %v1792
      %v1794 = vpop.xlane.xlu0 %1793
      %v1795 = vsel %vm512, %v1689, 0.0
      %1796 = vadd.xlane.f32.xlu0 %v1795
      %v1797 = vpop.xlane.xlu0 %1796
      %v1798 = vsel %vm512, %v1690, 0.0
      %1799 = vadd.xlane.f32.xlu0 %v1798
      %v1800 = vpop.xlane.xlu0 %1799
      %v1801 = vsel %vm512, %v1691, 0.0
      %1802 = vadd.xlane.f32.xlu0 %v1801
      %v1803 = vpop.xlane.xlu0 %1802
      %v1804 = vsel %vm512, %v1692, 0.0
      %1805 = vadd.xlane.f32.xlu0 %v1804
      %v1806 = vpop.xlane.xlu0 %1805
      %v1807 = vmul.f32 %v1695, %v907
      %v1808 = vmul.f32 %v1698, %v907
      %v1809 = vmul.f32 %v1701, %v907
      %v1810 = vmul.f32 %v1704, %v907
      %v1811 = vmul.f32 %v1707, %v907
      %v1812 = vmul.f32 %v1710, %v907
      %v1813 = vmul.f32 %v1713, %v907
      %v1814 = vmul.f32 %v1716, %v907
      %v1815 = vmul.f32 %v1719, %v907
      %v1816 = vmul.f32 %v1722, %v907
      %v1817 = vmul.f32 %v1725, %v907
      %v1818 = vmul.f32 %v1728, %v907
      %v1819 = vmul.f32 %v1731, %v907
      %v1820 = vmul.f32 %v1734, %v907
      %v1821 = vmul.f32 %v1737, %v907
      %v1822 = vmul.f32 %v1740, %v907
      %v1823 = vmul.f32 %v1743, %v907
      %v1824 = vmul.f32 %v1746, %v907
      %v1825 = vmul.f32 %v1749, %v907
      %v1826 = vmul.f32 %v1752, %v907
      %v1827 = vmul.f32 %v1755, %v907
      %v1828 = vmul.f32 %v1758, %v907
      %v1829 = vmul.f32 %v1761, %v907
      %v1830 = vmul.f32 %v1764, %v907
      %v1831 = vmul.f32 %v1767, %v907
      %v1832 = vmul.f32 %v1770, %v907
      %v1833 = vmul.f32 %v1773, %v907
      %v1834 = vmul.f32 %v1776, %v907
      %v1835 = vmul.f32 %v1779, %v907
      %v1836 = vmul.f32 %v1782, %v907
      %v1837 = vmul.f32 %v1785, %v907
      %v1838 = vmul.f32 %v1788, %v907
      %v1839 = vmul.f32 %v1791, %v907
      %v1840 = vmul.f32 %v1794, %v907
      %v1841 = vmul.f32 %v1797, %v907
      %v1842 = vmul.f32 %v1800, %v907
      %v1843 = vmul.f32 %v1803, %v907
      %v1844 = vmul.f32 %v1806, %v907
      %v1845 = vadd.f32 %v1807, 1e-06
      %v1846 = vadd.f32 %v1808, 1e-06
      %v1847 = vadd.f32 %v1809, 1e-06
      %v1848 = vadd.f32 %v1810, 1e-06
      %v1849 = vadd.f32 %v1811, 1e-06
      %v1850 = vadd.f32 %v1812, 1e-06
      %v1851 = vadd.f32 %v1813, 1e-06
      %v1852 = vadd.f32 %v1814, 1e-06
      %v1853 = vadd.f32 %v1815, 1e-06
      %v1854 = vadd.f32 %v1816, 1e-06
      %v1855 = vadd.f32 %v1817, 1e-06
      %v1856 = vadd.f32 %v1818, 1e-06
      %v1857 = vadd.f32 %v1819, 1e-06
      %v1858 = vadd.f32 %v1820, 1e-06
      %v1859 = vadd.f32 %v1821, 1e-06
      %v1860 = vadd.f32 %v1822, 1e-06
      %v1861 = vadd.f32 %v1823, 1e-06
      %v1862 = vadd.f32 %v1824, 1e-06
      %v1863 = vadd.f32 %v1825, 1e-06
      %v1864 = vadd.f32 %v1826, 1e-06
      %v1865 = vadd.f32 %v1827, 1e-06
      %v1866 = vadd.f32 %v1828, 1e-06
      %v1867 = vadd.f32 %v1829, 1e-06
      %v1868 = vadd.f32 %v1830, 1e-06
      %v1869 = vadd.f32 %v1831, 1e-06
      %v1870 = vadd.f32 %v1832, 1e-06
      %v1871 = vadd.f32 %v1833, 1e-06
      %v1872 = vadd.f32 %v1834, 1e-06
      %v1873 = vadd.f32 %v1835, 1e-06
      %v1874 = vadd.f32 %v1836, 1e-06
      %v1875 = vadd.f32 %v1837, 1e-06
      %v1876 = vadd.f32 %v1838, 1e-06
      %v1877 = vadd.f32 %v1839, 1e-06
      %v1878 = vadd.f32 %v1840, 1e-06
      %v1879 = vadd.f32 %v1841, 1e-06
      %v1880 = vadd.f32 %v1842, 1e-06
      %v1881 = vadd.f32 %v1843, 1e-06
      %v1882 = vadd.f32 %v1844, 1e-06
      %v1883 = vrsqrt.pop %v1845
      %v1884 = vrsqrt.pop %v1846
      %v1885 = vrsqrt.pop %v1847
      %v1886 = vrsqrt.pop %v1848
      %v1887 = vrsqrt.pop %v1849
      %v1888 = vrsqrt.pop %v1850
      %v1889 = vrsqrt.pop %v1851
      %v1890 = vrsqrt.pop %v1852
      %v1891 = vrsqrt.pop %v1853
      %v1892 = vrsqrt.pop %v1854
      %v1893 = vrsqrt.pop %v1855
      %v1894 = vrsqrt.pop %v1856
      %v1895 = vrsqrt.pop %v1857
      %v1896 = vrsqrt.pop %v1858
      %v1897 = vrsqrt.pop %v1859
      %v1898 = vrsqrt.pop %v1860
      %v1899 = vrsqrt.pop %v1861
      %v1900 = vrsqrt.pop %v1862
      %v1901 = vrsqrt.pop %v1863
      %v1902 = vrsqrt.pop %v1864
      %v1903 = vrsqrt.pop %v1865
      %v1904 = vrsqrt.pop %v1866
      %v1905 = vrsqrt.pop %v1867
      %v1906 = vrsqrt.pop %v1868
      %v1907 = vrsqrt.pop %v1869
      %v1908 = vrsqrt.pop %v1870
      %v1909 = vrsqrt.pop %v1871
      %v1910 = vrsqrt.pop %v1872
      %v1911 = vrsqrt.pop %v1873
      %v1912 = vrsqrt.pop %v1874
      %v1913 = vrsqrt.pop %v1875
      %v1914 = vrsqrt.pop %v1876
      %v1915 = vrsqrt.pop %v1877
      %v1916 = vrsqrt.pop %v1878
      %v1917 = vrsqrt.pop %v1879
      %v1918 = vrsqrt.pop %v1880
      %v1919 = vrsqrt.pop %v1881
      %v1920 = vrsqrt.pop %v1882
      %v1921 = vmul.f32 %v1505, %v1883
      %v1922 = vmul.f32 %v1508, %v1884
      %v1923 = vmul.f32 %v1513, %v1885
      %v1924 = vmul.f32 %v1516, %v1886
      %v1925 = vmul.f32 %v1521, %v1887
      %v1926 = vmul.f32 %v1524, %v1888
      %v1927 = vmul.f32 %v1529, %v1889
      %v1928 = vmul.f32 %v1532, %v1890
      %v1929 = vmul.f32 %v1537, %v1891
      %v1930 = vmul.f32 %v1540, %v1892
      %v1931 = vmul.f32 %v1545, %v1893
      %v1932 = vmul.f32 %v1548, %v1894
      %v1933 = vmul.f32 %v1553, %v1895
      %v1934 = vmul.f32 %v1556, %v1896
      %v1935 = vmul.f32 %v1561, %v1897
      %v1936 = vmul.f32 %v1564, %v1898
      %v1937 = vmul.f32 %v1569, %v1899
      %v1938 = vmul.f32 %v1572, %v1900
      %v1939 = vmul.f32 %v1577, %v1901
      %v1940 = vmul.f32 %v1580, %v1902
      %v1941 = vmul.f32 %v1585, %v1903
      %v1942 = vmul.f32 %v1588, %v1904
      %v1943 = vmul.f32 %v1593, %v1905
      %v1944 = vmul.f32 %v1596, %v1906
      %v1945 = vmul.f32 %v1601, %v1907
      %v1946 = vmul.f32 %v1604, %v1908
      %v1947 = vmul.f32 %v1609, %v1909
      %v1948 = vmul.f32 %v1612, %v1910
      %v1949 = vmul.f32 %v1617, %v1911
      %v1950 = vmul.f32 %v1620, %v1912
      %v1951 = vmul.f32 %v1625, %v1913
      %v1952 = vmul.f32 %v1628, %v1914
      %v1953 = vmul.f32 %v1633, %v1915
      %v1954 = vmul.f32 %v1636, %v1916
      %v1955 = vmul.f32 %v1641, %v1917
      %v1956 = vmul.f32 %v1644, %v1918
      %v1957 = vmul.f32 %v1649, %v1919
      %v1958 = vmul.f32 %v1652, %v1920
      %v1959 = vld [vmem:[%s6] sm:$0x1]
      %v1961 = vlaneseq
      %v1962 = vshrl.u32 %v1961, 7
      %v1963 = vsub.s32 0, %v1962
      %v1964 = vrot.slane %v1959, %v1963
      %v1966 = vmul.f32 %v1921, %v1964
      %v1967 = vmul.f32 %v1922, %v1964
      %v1968 = vmul.f32 %v1923, %v1964
      %v1969 = vmul.f32 %v1924, %v1964
      %v1970 = vmul.f32 %v1925, %v1964
      %v1971 = vmul.f32 %v1926, %v1964
      %v1972 = vmul.f32 %v1927, %v1964
      %v1973 = vmul.f32 %v1928, %v1964
      %v1974 = vmul.f32 %v1929, %v1964
      %v1975 = vmul.f32 %v1930, %v1964
      %v1976 = vmul.f32 %v1931, %v1964
      %v1977 = vmul.f32 %v1932, %v1964
      %v1978 = vmul.f32 %v1933, %v1964
      %v1979 = vmul.f32 %v1934, %v1964
      %v1980 = vmul.f32 %v1935, %v1964
      %v1981 = vmul.f32 %v1936, %v1964
      %v1982 = vmul.f32 %v1937, %v1964
      %v1983 = vmul.f32 %v1938, %v1964
      %v1984 = vmul.f32 %v1939, %v1964
      %v1985 = vmul.f32 %v1940, %v1964
      %v1986 = vmul.f32 %v1941, %v1964
      %v1987 = vmul.f32 %v1942, %v1964
      %v1988 = vmul.f32 %v1943, %v1964
      %v1989 = vmul.f32 %v1944, %v1964
      %v1990 = vmul.f32 %v1945, %v1964
      %v1991 = vmul.f32 %v1946, %v1964
      %v1992 = vmul.f32 %v1947, %v1964
      %v1993 = vmul.f32 %v1948, %v1964
      %v1994 = vmul.f32 %v1949, %v1964
      %v1995 = vmul.f32 %v1950, %v1964
      %v1996 = vmul.f32 %v1951, %v1964
      %v1997 = vmul.f32 %v1952, %v1964
      %v1998 = vmul.f32 %v1953, %v1964
      %v1999 = vmul.f32 %v1954, %v1964
      %v2000 = vmul.f32 %v1955, %v1964
      %v2001 = vmul.f32 %v1956, %v1964
      %v2002 = vmul.f32 %v1957, %v1964
      %v2003 = vmul.f32 %v1958, %v1964
      %v2004 = vxor.u32 %v1966, 2147483648
      %v2005 = vxor.u32 %v1967, 2147483648
      %v2006 = vxor.u32 %v1968, 2147483648
      %v2007 = vxor.u32 %v1969, 2147483648
      %v2008 = vxor.u32 %v1970, 2147483648
      %v2009 = vxor.u32 %v1971, 2147483648
      %v2010 = vxor.u32 %v1972, 2147483648
      %v2011 = vxor.u32 %v1973, 2147483648
      %v2012 = vxor.u32 %v1974, 2147483648
      %v2013 = vxor.u32 %v1975, 2147483648
      %v2014 = vxor.u32 %v1976, 2147483648
      %v2015 = vxor.u32 %v1977, 2147483648
      %v2016 = vxor.u32 %v1978, 2147483648
      %v2017 = vxor.u32 %v1979, 2147483648
      %v2018 = vxor.u32 %v1980, 2147483648
      %v2019 = vxor.u32 %v1981, 2147483648
      %v2020 = vxor.u32 %v1982, 2147483648
      %v2021 = vxor.u32 %v1983, 2147483648
      %v2022 = vxor.u32 %v1984, 2147483648
      %v2023 = vxor.u32 %v1985, 2147483648
      %v2024 = vxor.u32 %v1986, 2147483648
      %v2025 = vxor.u32 %v1987, 2147483648
      %v2026 = vxor.u32 %v1988, 2147483648
      %v2027 = vxor.u32 %v1989, 2147483648
      %v2028 = vxor.u32 %v1990, 2147483648
      %v2029 = vxor.u32 %v1991, 2147483648
      %v2030 = vxor.u32 %v1992, 2147483648
      %v2031 = vxor.u32 %v1993, 2147483648
      %v2032 = vxor.u32 %v1994, 2147483648
      %v2033 = vxor.u32 %v1995, 2147483648
      %v2034 = vxor.u32 %v1996, 2147483648
      %v2035 = vxor.u32 %v1997, 2147483648
      %v2036 = vxor.u32 %v1998, 2147483648
      %v2037 = vxor.u32 %v1999, 2147483648
      %v2038 = vxor.u32 %v2000, 2147483648
      %v2039 = vxor.u32 %v2001, 2147483648
      %v2040 = vxor.u32 %v2002, 2147483648
      %v2041 = vxor.u32 %v2003, 2147483648
      %v2042 = vmul.f32 %v2004, 1.442695
      %v2043 = vpow.pop %v2042
      %v2044 = vmul.f32 %v2005, 1.442695
      %v2045 = vpow.pop %v2044
      %v2046 = vmul.f32 %v2006, 1.442695
      %v2047 = vpow.pop %v2046
      %v2048 = vmul.f32 %v2007, 1.442695
      %v2049 = vpow.pop %v2048
      %v2050 = vmul.f32 %v2008, 1.442695
      %v2051 = vpow.pop %v2050
      %v2052 = vmul.f32 %v2009, 1.442695
      %v2053 = vpow.pop %v2052
      %v2054 = vmul.f32 %v2010, 1.442695
      %v2055 = vpow.pop %v2054
      %v2056 = vmul.f32 %v2011, 1.442695
      %v2057 = vpow.pop %v2056
      %v2058 = vmul.f32 %v2012, 1.442695
      %v2059 = vpow.pop %v2058
      %v2060 = vmul.f32 %v2013, 1.442695
      %v2061 = vpow.pop %v2060
      %v2062 = vmul.f32 %v2014, 1.442695
      %v2063 = vpow.pop %v2062
      %v2064 = vmul.f32 %v2015, 1.442695
      %v2065 = vpow.pop %v2064
      %v2066 = vmul.f32 %v2016, 1.442695
      %v2067 = vpow.pop %v2066
      %v2068 = vmul.f32 %v2017, 1.442695
      %v2069 = vpow.pop %v2068
      %v2070 = vmul.f32 %v2018, 1.442695
      %v2071 = vpow.pop %v2070
      %v2072 = vmul.f32 %v2019, 1.442695
      %v2073 = vpow.pop %v2072
      %v2074 = vmul.f32 %v2020, 1.442695
      %v2075 = vpow.pop %v2074
      %v2076 = vmul.f32 %v2021, 1.442695
      %v2077 = vpow.pop %v2076
      %v2078 = vmul.f32 %v2022, 1.442695
      %v2079 = vpow.pop %v2078
      %v2080 = vmul.f32 %v2023, 1.442695
      %v2081 = vpow.pop %v2080
      %v2082 = vmul.f32 %v2024, 1.442695
      %v2083 = vpow.pop %v2082
      %v2084 = vmul.f32 %v2025, 1.442695
      %v2085 = vpow.pop %v2084
      %v2086 = vmul.f32 %v2026, 1.442695
      %v2087 = vpow.pop %v2086
      %v2088 = vmul.f32 %v2027, 1.442695
      %v2089 = vpow.pop %v2088
      %v2090 = vmul.f32 %v2028, 1.442695
      %v2091 = vpow.pop %v2090
      %v2092 = vmul.f32 %v2029, 1.442695
      %v2093 = vpow.pop %v2092
      %v2094 = vmul.f32 %v2030, 1.442695
      %v2095 = vpow.pop %v2094
      %v2096 = vmul.f32 %v2031, 1.442695
      %v2097 = vpow.pop %v2096
      %v2098 = vmul.f32 %v2032, 1.442695
      %v2099 = vpow.pop %v2098
      %v2100 = vmul.f32 %v2033, 1.442695
      %v2101 = vpow.pop %v2100
      %v2102 = vmul.f32 %v2034, 1.442695
      %v2103 = vpow.pop %v2102
      %v2104 = vmul.f32 %v2035, 1.442695
      %v2105 = vpow.pop %v2104
      %v2106 = vmul.f32 %v2036, 1.442695
      %v2107 = vpow.pop %v2106
      %v2108 = vmul.f32 %v2037, 1.442695
      %v2109 = vpow.pop %v2108
      %v2110 = vmul.f32 %v2038, 1.442695
      %v2111 = vpow.pop %v2110
      %v2112 = vmul.f32 %v2039, 1.442695
      %v2113 = vpow.pop %v2112
      %v2114 = vmul.f32 %v2040, 1.442695
      %v2115 = vpow.pop %v2114
      %v2116 = vmul.f32 %v2041, 1.442695
      %v2117 = vpow.pop %v2116
      %v2118 = vadd.f32 %v2043, 1.0
      %v2119 = vadd.f32 %v2045, 1.0
      %v2120 = vadd.f32 %v2047, 1.0
      %v2121 = vadd.f32 %v2049, 1.0
      %v2122 = vadd.f32 %v2051, 1.0
      %v2123 = vadd.f32 %v2053, 1.0
      %v2124 = vadd.f32 %v2055, 1.0
      %v2125 = vadd.f32 %v2057, 1.0
      %v2126 = vadd.f32 %v2059, 1.0
      %v2127 = vadd.f32 %v2061, 1.0
      %v2128 = vadd.f32 %v2063, 1.0
      %v2129 = vadd.f32 %v2065, 1.0
      %v2130 = vadd.f32 %v2067, 1.0
      %v2131 = vadd.f32 %v2069, 1.0
      %v2132 = vadd.f32 %v2071, 1.0
      %v2133 = vadd.f32 %v2073, 1.0
      %v2134 = vadd.f32 %v2075, 1.0
      %v2135 = vadd.f32 %v2077, 1.0
      %v2136 = vadd.f32 %v2079, 1.0
      %v2137 = vadd.f32 %v2081, 1.0
      %v2138 = vadd.f32 %v2083, 1.0
      %v2139 = vadd.f32 %v2085, 1.0
      %v2140 = vadd.f32 %v2087, 1.0
      %v2141 = vadd.f32 %v2089, 1.0
      %v2142 = vadd.f32 %v2091, 1.0
      %v2143 = vadd.f32 %v2093, 1.0
      %v2144 = vadd.f32 %v2095, 1.0
      %v2145 = vadd.f32 %v2097, 1.0
      %v2146 = vadd.f32 %v2099, 1.0
      %v2147 = vadd.f32 %v2101, 1.0
      %v2148 = vadd.f32 %v2103, 1.0
      %v2149 = vadd.f32 %v2105, 1.0
      %v2150 = vadd.f32 %v2107, 1.0
      %v2151 = vadd.f32 %v2109, 1.0
      %v2152 = vadd.f32 %v2111, 1.0
      %v2153 = vadd.f32 %v2113, 1.0
      %v2154 = vadd.f32 %v2115, 1.0
      %v2155 = vadd.f32 %v2117, 1.0
      %v2156 = vrcp.pop %v2118
      %v2157 = vmul.f32 1.0, %v2156
      %v2158 = vrcp.pop %v2119
      %v2159 = vmul.f32 1.0, %v2158
      %v2160 = vrcp.pop %v2120
      %v2161 = vmul.f32 1.0, %v2160
      %v2162 = vrcp.pop %v2121
      %v2163 = vmul.f32 1.0, %v2162
      %v2164 = vrcp.pop %v2122
      %v2165 = vmul.f32 1.0, %v2164
      %v2166 = vrcp.pop %v2123
      %v2167 = vmul.f32 1.0, %v2166
      %v2168 = vrcp.pop %v2124
      %v2169 = vmul.f32 1.0, %v2168
      %v2170 = vrcp.pop %v2125
      %v2171 = vmul.f32 1.0, %v2170
      %v2172 = vrcp.pop %v2126
      %v2173 = vmul.f32 1.0, %v2172
      %v2174 = vrcp.pop %v2127
      %v2175 = vmul.f32 1.0, %v2174
      %v2176 = vrcp.pop %v2128
      %v2177 = vmul.f32 1.0, %v2176
      %v2178 = vrcp.pop %v2129
      %v2179 = vmul.f32 1.0, %v2178
      %v2180 = vrcp.pop %v2130
      %v2181 = vmul.f32 1.0, %v2180
      %v2182 = vrcp.pop %v2131
      %v2183 = vmul.f32 1.0, %v2182
      %v2184 = vrcp.pop %v2132
      %v2185 = vmul.f32 1.0, %v2184
      %v2186 = vrcp.pop %v2133
      %v2187 = vmul.f32 1.0, %v2186
      %v2188 = vrcp.pop %v2134
      %v2189 = vmul.f32 1.0, %v2188
      %v2190 = vrcp.pop %v2135
      %v2191 = vmul.f32 1.0, %v2190
      %v2192 = vrcp.pop %v2136
      %v2193 = vmul.f32 1.0, %v2192
      %v2194 = vrcp.pop %v2137
      %v2195 = vmul.f32 1.0, %v2194
      %v2196 = vrcp.pop %v2138
      %v2197 = vmul.f32 1.0, %v2196
      %v2198 = vrcp.pop %v2139
      %v2199 = vmul.f32 1.0, %v2198
      %v2200 = vrcp.pop %v2140
      %v2201 = vmul.f32 1.0, %v2200
      %v2202 = vrcp.pop %v2141
      %v2203 = vmul.f32 1.0, %v2202
      %v2204 = vrcp.pop %v2142
      %v2205 = vmul.f32 1.0, %v2204
      %v2206 = vrcp.pop %v2143
      %v2207 = vmul.f32 1.0, %v2206
      %v2208 = vrcp.pop %v2144
      %v2209 = vmul.f32 1.0, %v2208
      %v2210 = vrcp.pop %v2145
      %v2211 = vmul.f32 1.0, %v2210
      %v2212 = vrcp.pop %v2146
      %v2213 = vmul.f32 1.0, %v2212
      %v2214 = vrcp.pop %v2147
      %v2215 = vmul.f32 1.0, %v2214
      %v2216 = vrcp.pop %v2148
      %v2217 = vmul.f32 1.0, %v2216
      %v2218 = vrcp.pop %v2149
      %v2219 = vmul.f32 1.0, %v2218
      %v2220 = vrcp.pop %v2150
      %v2221 = vmul.f32 1.0, %v2220
      %v2222 = vrcp.pop %v2151
      %v2223 = vmul.f32 1.0, %v2222
      %v2224 = vrcp.pop %v2152
      %v2225 = vmul.f32 1.0, %v2224
      %v2226 = vrcp.pop %v2153
      %v2227 = vmul.f32 1.0, %v2226
      %v2228 = vrcp.pop %v2154
      %v2229 = vmul.f32 1.0, %v2228
      %v2230 = vrcp.pop %v2155
      %v2231 = vmul.f32 1.0, %v2230
      %v2232 = vmul.f32 %v1966, %v2157
      %v2233 = vmul.f32 %v1967, %v2159
      %v2234 = vmul.f32 %v1968, %v2161
      %v2235 = vmul.f32 %v1969, %v2163
      %v2236 = vmul.f32 %v1970, %v2165
      %v2237 = vmul.f32 %v1971, %v2167
      %v2238 = vmul.f32 %v1972, %v2169
      %v2239 = vmul.f32 %v1973, %v2171
      %v2240 = vmul.f32 %v1974, %v2173
      %v2241 = vmul.f32 %v1975, %v2175
      %v2242 = vmul.f32 %v1976, %v2177
      %v2243 = vmul.f32 %v1977, %v2179
      %v2244 = vmul.f32 %v1978, %v2181
      %v2245 = vmul.f32 %v1979, %v2183
      %v2246 = vmul.f32 %v1980, %v2185
      %v2247 = vmul.f32 %v1981, %v2187
      %v2248 = vmul.f32 %v1982, %v2189
      %v2249 = vmul.f32 %v1983, %v2191
      %v2250 = vmul.f32 %v1984, %v2193
      %v2251 = vmul.f32 %v1985, %v2195
      %v2252 = vmul.f32 %v1986, %v2197
      %v2253 = vmul.f32 %v1987, %v2199
      %v2254 = vmul.f32 %v1988, %v2201
      %v2255 = vmul.f32 %v1989, %v2203
      %v2256 = vmul.f32 %v1990, %v2205
      %v2257 = vmul.f32 %v1991, %v2207
      %v2258 = vmul.f32 %v1992, %v2209
      %v2259 = vmul.f32 %v1993, %v2211
      %v2260 = vmul.f32 %v1994, %v2213
      %v2261 = vmul.f32 %v1995, %v2215
      %v2262 = vmul.f32 %v1996, %v2217
      %v2263 = vmul.f32 %v1997, %v2219
      %v2264 = vmul.f32 %v1998, %v2221
      %v2265 = vmul.f32 %v1999, %v2223
      %v2266 = vmul.f32 %v2000, %v2225
      %v2267 = vmul.f32 %v2001, %v2227
      %v2268 = vmul.f32 %v2002, %v2229
      %v2269 = vmul.f32 %v2003, %v2231
      %v2270 = vld [vmem:[%s7] sm:$0x1]
      %v2272 = vlaneseq
      %v2273 = vshrl.u32 %v2272, 7
      %v2274 = vsub.s32 0, %v2273
      %v2275 = vrot.slane %v2270, %v2274
      %v2277 = vmul.f32 %v2232, %v2275
      %v2278 = vmul.f32 %v2233, %v2275
      %v2279 = vmul.f32 %v2234, %v2275
      %v2280 = vmul.f32 %v2235, %v2275
      %v2281 = vmul.f32 %v2236, %v2275
      %v2282 = vmul.f32 %v2237, %v2275
      %v2283 = vmul.f32 %v2238, %v2275
      %v2284 = vmul.f32 %v2239, %v2275
      %v2285 = vmul.f32 %v2240, %v2275
      %v2286 = vmul.f32 %v2241, %v2275
      %v2287 = vmul.f32 %v2242, %v2275
      %v2288 = vmul.f32 %v2243, %v2275
      %v2289 = vmul.f32 %v2244, %v2275
      %v2290 = vmul.f32 %v2245, %v2275
      %v2291 = vmul.f32 %v2246, %v2275
      %v2292 = vmul.f32 %v2247, %v2275
      %v2293 = vmul.f32 %v2248, %v2275
      %v2294 = vmul.f32 %v2249, %v2275
      %v2295 = vmul.f32 %v2250, %v2275
      %v2296 = vmul.f32 %v2251, %v2275
      %v2297 = vmul.f32 %v2252, %v2275
      %v2298 = vmul.f32 %v2253, %v2275
      %v2299 = vmul.f32 %v2254, %v2275
      %v2300 = vmul.f32 %v2255, %v2275
      %v2301 = vmul.f32 %v2256, %v2275
      %v2302 = vmul.f32 %v2257, %v2275
      %v2303 = vmul.f32 %v2258, %v2275
      %v2304 = vmul.f32 %v2259, %v2275
      %v2305 = vmul.f32 %v2260, %v2275
      %v2306 = vmul.f32 %v2261, %v2275
      %v2307 = vmul.f32 %v2262, %v2275
      %v2308 = vmul.f32 %v2263, %v2275
      %v2309 = vmul.f32 %v2264, %v2275
      %v2310 = vmul.f32 %v2265, %v2275
      %v2311 = vmul.f32 %v2266, %v2275
      %v2312 = vmul.f32 %v2267, %v2275
      %v2313 = vmul.f32 %v2268, %v2275
      %v2314 = vmul.f32 %v2269, %v2275
      %v2315 = vsel %vm512, %v2277, 0.0
      %2316 = vadd.xlane.f32.xlu0 %v2315
      %v2317 = vpop.xlane.xlu0 %2316
      %v2318 = vsel %vm512, %v2278, 0.0
      %2319 = vadd.xlane.f32.xlu0 %v2318
      %v2320 = vpop.xlane.xlu0 %2319
      %v2321 = vsel %vm512, %v2279, 0.0
      %2322 = vadd.xlane.f32.xlu0 %v2321
      %v2323 = vpop.xlane.xlu0 %2322
      %v2324 = vsel %vm512, %v2280, 0.0
      %2325 = vadd.xlane.f32.xlu0 %v2324
      %v2326 = vpop.xlane.xlu0 %2325
      %v2327 = vsel %vm512, %v2281, 0.0
      %2328 = vadd.xlane.f32.xlu0 %v2327
      %v2329 = vpop.xlane.xlu0 %2328
      %v2330 = vsel %vm512, %v2282, 0.0
      %2331 = vadd.xlane.f32.xlu0 %v2330
      %v2332 = vpop.xlane.xlu0 %2331
      %v2333 = vsel %vm512, %v2283, 0.0
      %2334 = vadd.xlane.f32.xlu0 %v2333
      %v2335 = vpop.xlane.xlu0 %2334
      %v2336 = vsel %vm512, %v2284, 0.0
      %2337 = vadd.xlane.f32.xlu0 %v2336
      %v2338 = vpop.xlane.xlu0 %2337
      %v2339 = vsel %vm512, %v2285, 0.0
      %2340 = vadd.xlane.f32.xlu0 %v2339
      %v2341 = vpop.xlane.xlu0 %2340
      %v2342 = vsel %vm512, %v2286, 0.0
      %2343 = vadd.xlane.f32.xlu0 %v2342
      %v2344 = vpop.xlane.xlu0 %2343
      %v2345 = vsel %vm512, %v2287, 0.0
      %2346 = vadd.xlane.f32.xlu0 %v2345
      %v2347 = vpop.xlane.xlu0 %2346
      %v2348 = vsel %vm512, %v2288, 0.0
      %2349 = vadd.xlane.f32.xlu0 %v2348
      %v2350 = vpop.xlane.xlu0 %2349
      %v2351 = vsel %vm512, %v2289, 0.0
      %2352 = vadd.xlane.f32.xlu0 %v2351
      %v2353 = vpop.xlane.xlu0 %2352
      %v2354 = vsel %vm512, %v2290, 0.0
      %2355 = vadd.xlane.f32.xlu0 %v2354
      %v2356 = vpop.xlane.xlu0 %2355
      %v2357 = vsel %vm512, %v2291, 0.0
      %2358 = vadd.xlane.f32.xlu0 %v2357
      %v2359 = vpop.xlane.xlu0 %2358
      %v2360 = vsel %vm512, %v2292, 0.0
      %2361 = vadd.xlane.f32.xlu0 %v2360
      %v2362 = vpop.xlane.xlu0 %2361
      %v2363 = vsel %vm512, %v2293, 0.0
      %2364 = vadd.xlane.f32.xlu0 %v2363
      %v2365 = vpop.xlane.xlu0 %2364
      %v2366 = vsel %vm512, %v2294, 0.0
      %2367 = vadd.xlane.f32.xlu0 %v2366
      %v2368 = vpop.xlane.xlu0 %2367
      %v2369 = vsel %vm512, %v2295, 0.0
      %2370 = vadd.xlane.f32.xlu0 %v2369
      %v2371 = vpop.xlane.xlu0 %2370
      %v2372 = vsel %vm512, %v2296, 0.0
      %2373 = vadd.xlane.f32.xlu0 %v2372
      %v2374 = vpop.xlane.xlu0 %2373
      %v2375 = vsel %vm512, %v2297, 0.0
      %2376 = vadd.xlane.f32.xlu0 %v2375
      %v2377 = vpop.xlane.xlu0 %2376
      %v2378 = vsel %vm512, %v2298, 0.0
      %2379 = vadd.xlane.f32.xlu0 %v2378
      %v2380 = vpop.xlane.xlu0 %2379
      %v2381 = vsel %vm512, %v2299, 0.0
      %2382 = vadd.xlane.f32.xlu0 %v2381
      %v2383 = vpop.xlane.xlu0 %2382
      %v2384 = vsel %vm512, %v2300, 0.0
      %2385 = vadd.xlane.f32.xlu0 %v2384
      %v2386 = vpop.xlane.xlu0 %2385
      %v2387 = vsel %vm512, %v2301, 0.0
      %2388 = vadd.xlane.f32.xlu0 %v2387
      %v2389 = vpop.xlane.xlu0 %2388
      %v2390 = vsel %vm512, %v2302, 0.0
      %2391 = vadd.xlane.f32.xlu0 %v2390
      %v2392 = vpop.xlane.xlu0 %2391
      %v2393 = vsel %vm512, %v2303, 0.0
      %2394 = vadd.xlane.f32.xlu0 %v2393
      %v2395 = vpop.xlane.xlu0 %2394
      %v2396 = vsel %vm512, %v2304, 0.0
      %2397 = vadd.xlane.f32.xlu0 %v2396
      %v2398 = vpop.xlane.xlu0 %2397
      %v2399 = vsel %vm512, %v2305, 0.0
      %2400 = vadd.xlane.f32.xlu0 %v2399
      %v2401 = vpop.xlane.xlu0 %2400
      %v2402 = vsel %vm512, %v2306, 0.0
      %2403 = vadd.xlane.f32.xlu0 %v2402
      %v2404 = vpop.xlane.xlu0 %2403
      %v2405 = vsel %vm512, %v2307, 0.0
      %2406 = vadd.xlane.f32.xlu0 %v2405
      %v2407 = vpop.xlane.xlu0 %2406
      %v2408 = vsel %vm512, %v2308, 0.0
      %2409 = vadd.xlane.f32.xlu0 %v2408
      %v2410 = vpop.xlane.xlu0 %2409
      %v2411 = vsel %vm512, %v2309, 0.0
      %2412 = vadd.xlane.f32.xlu0 %v2411
      %v2413 = vpop.xlane.xlu0 %2412
      %v2414 = vsel %vm512, %v2310, 0.0
      %2415 = vadd.xlane.f32.xlu0 %v2414
      %v2416 = vpop.xlane.xlu0 %2415
      %v2417 = vsel %vm512, %v2311, 0.0
      %2418 = vadd.xlane.f32.xlu0 %v2417
      %v2419 = vpop.xlane.xlu0 %2418
      %v2420 = vsel %vm512, %v2312, 0.0
      %2421 = vadd.xlane.f32.xlu0 %v2420
      %v2422 = vpop.xlane.xlu0 %2421
      %v2423 = vsel %vm512, %v2313, 0.0
      %2424 = vadd.xlane.f32.xlu0 %v2423
      %v2425 = vpop.xlane.xlu0 %2424
      %v2426 = vsel %vm512, %v2314, 0.0
      %2427 = vadd.xlane.f32.xlu0 %v2426
      %v2428 = vpop.xlane.xlu0 %2427
      %v2429 = vld [vmem:[#allocation2] sm:$0x1]
      %v2431 = vlaneseq
      %v2432 = vshrl.u32 %v2431, 7
      %v2433 = vsub.s32 0, %v2432
      %v2434 = vrot.slane %v2429, %v2433
      %v2436 = vadd.f32 %v2317, %v2434
      %v2437 = vadd.f32 %v2320, %v2434
      %v2438 = vadd.f32 %v2323, %v2434
      %v2439 = vadd.f32 %v2326, %v2434
      %v2440 = vadd.f32 %v2329, %v2434
      %v2441 = vadd.f32 %v2332, %v2434
      %v2442 = vadd.f32 %v2335, %v2434
      %v2443 = vadd.f32 %v2338, %v2434
      %v2444 = vadd.f32 %v2341, %v2434
      %v2445 = vadd.f32 %v2344, %v2434
      %v2446 = vadd.f32 %v2347, %v2434
      %v2447 = vadd.f32 %v2350, %v2434
      %v2448 = vadd.f32 %v2353, %v2434
      %v2449 = vadd.f32 %v2356, %v2434
      %v2450 = vadd.f32 %v2359, %v2434
      %v2451 = vadd.f32 %v2362, %v2434
      %v2452 = vadd.f32 %v2365, %v2434
      %v2453 = vadd.f32 %v2368, %v2434
      %v2454 = vadd.f32 %v2371, %v2434
      %v2455 = vadd.f32 %v2374, %v2434
      %v2456 = vadd.f32 %v2377, %v2434
      %v2457 = vadd.f32 %v2380, %v2434
      %v2458 = vadd.f32 %v2383, %v2434
      %v2459 = vadd.f32 %v2386, %v2434
      %v2460 = vadd.f32 %v2389, %v2434
      %v2461 = vadd.f32 %v2392, %v2434
      %v2462 = vadd.f32 %v2395, %v2434
      %v2463 = vadd.f32 %v2398, %v2434
      %v2464 = vadd.f32 %v2401, %v2434
      %v2465 = vadd.f32 %v2404, %v2434
      %v2466 = vadd.f32 %v2407, %v2434
      %v2467 = vadd.f32 %v2410, %v2434
      %v2468 = vadd.f32 %v2413, %v2434
      %v2469 = vadd.f32 %v2416, %v2434
      %v2470 = vadd.f32 %v2419, %v2434
      %v2471 = vadd.f32 %v2422, %v2434
      %v2472 = vadd.f32 %v2425, %v2434
      %v2473 = vadd.f32 %v2428, %v2434
      %2474 = vxpose.xlu0.b32.start [1/16] %v2436, 128
      %2475 = vxpose.xlu0.b32.cont [2/16] %v2437, 128
      %2476 = vxpose.xlu0.b32.cont [3/16] %v2438, 128
      %2477 = vxpose.xlu0.b32.cont [4/16] %v2439, 128
      %2478 = vxpose.xlu0.b32.cont [5/16] %v2440, 128
      %2479 = vxpose.xlu0.b32.cont [6/16] %v2441, 128
      %2480 = vxpose.xlu0.b32.cont [7/16] %v2442, 128
      %2481 = vxpose.xlu0.b32.cont [8/16] %v2443, 128
      %2482 = vxpose.xlu0.b32.cont [9/16] %v2444, 128
      %2483 = vxpose.xlu0.b32.cont [10/16] %v2445, 128
      %2484 = vxpose.xlu0.b32.cont [11/16] %v2446, 128
      %2485 = vxpose.xlu0.b32.cont [12/16] %v2447, 128
      %2486 = vxpose.xlu0.b32.cont [13/16] %v2448, 128
      %2487 = vxpose.xlu0.b32.cont [14/16] %v2449, 128
      %2488 = vxpose.xlu0.b32.cont [15/16] %v2450, 128
      %2489 = vxpose.xlu0.b32.end [16/16] %v2451, 128
      %v2490 = vpop.trf.xlu0
      %v2491 = vpop.trf.xlu0
      %v2492 = vpop.trf.xlu0
      %v2493 = vpop.trf.xlu0
      %v2494 = vpop.trf.xlu0
      %v2495 = vpop.trf.xlu0
      %v2496 = vpop.trf.xlu0
      %v2497 = vpop.trf.xlu0
      %v2498 = vpop.trf.xlu0
      %v2499 = vpop.trf.xlu0
      %v2500 = vpop.trf.xlu0
      %v2501 = vpop.trf.xlu0
      %v2502 = vpop.trf.xlu0
      %v2503 = vpop.trf.xlu0
      %v2504 = vpop.trf.xlu0
      %v2505 = vpop.trf.xlu0
      %2506 = vxpose.xlu0.b32.start [1/16] %v2452, 128
      %2507 = vxpose.xlu0.b32.cont [2/16] %v2453, 128
      %2508 = vxpose.xlu0.b32.cont [3/16] %v2454, 128
      %2509 = vxpose.xlu0.b32.cont [4/16] %v2455, 128
      %2510 = vxpose.xlu0.b32.cont [5/16] %v2456, 128
      %2511 = vxpose.xlu0.b32.cont [6/16] %v2457, 128
      %2512 = vxpose.xlu0.b32.cont [7/16] %v2458, 128
      %2513 = vxpose.xlu0.b32.cont [8/16] %v2459, 128
      %2514 = vxpose.xlu0.b32.cont [9/16] %v2460, 128
      %2515 = vxpose.xlu0.b32.cont [10/16] %v2461, 128
      %2516 = vxpose.xlu0.b32.cont [11/16] %v2462, 128
      %2517 = vxpose.xlu0.b32.cont [12/16] %v2463, 128
      %2518 = vxpose.xlu0.b32.cont [13/16] %v2464, 128
      %2519 = vxpose.xlu0.b32.cont [14/16] %v2465, 128
      %2520 = vxpose.xlu0.b32.cont [15/16] %v2466, 128
      %2521 = vxpose.xlu0.b32.end [16/16] %v2467, 128
      %v2522 = vpop.trf.xlu0
      %v2523 = vpop.trf.xlu0
      %v2524 = vpop.trf.xlu0
      %v2525 = vpop.trf.xlu0
      %v2526 = vpop.trf.xlu0
      %v2527 = vpop.trf.xlu0
      %v2528 = vpop.trf.xlu0
      %v2529 = vpop.trf.xlu0
      %v2530 = vpop.trf.xlu0
      %v2531 = vpop.trf.xlu0
      %v2532 = vpop.trf.xlu0
      %v2533 = vpop.trf.xlu0
      %v2534 = vpop.trf.xlu0
      %v2535 = vpop.trf.xlu0
      %v2536 = vpop.trf.xlu0
      %v2537 = vpop.trf.xlu0
      %2538 = vxpose.xlu0.b32.start [1/16] %v2468, 128
      %2539 = vxpose.xlu0.b32.cont [2/16] %v2469, 128
      %2540 = vxpose.xlu0.b32.cont [3/16] %v2470, 128
      %2541 = vxpose.xlu0.b32.cont [4/16] %v2471, 128
      %2542 = vxpose.xlu0.b32.cont [5/16] %v2472, 128
      %2543 = vxpose.xlu0.b32.cont [6/16] %v2473, 128
      %2544 = vxpose.xlu0.b32.cont [7/16] 0.0, 128
      %2545 = vxpose.xlu0.b32.cont [8/16] 0.0, 128
      %2546 = vxpose.xlu0.b32.cont [9/16] 0.0, 128
      %2547 = vxpose.xlu0.b32.cont [10/16] 0.0, 128
      %2548 = vxpose.xlu0.b32.cont [11/16] 0.0, 128
      %2549 = vxpose.xlu0.b32.cont [12/16] 0.0, 128
      %2550 = vxpose.xlu0.b32.cont [13/16] 0.0, 128
      %2551 = vxpose.xlu0.b32.cont [14/16] 0.0, 128
      %2552 = vxpose.xlu0.b32.cont [15/16] 0.0, 128
      %2553 = vxpose.xlu0.b32.end [16/16] 0.0, 128
      %v2554 = vpop.trf.xlu0
      %v2555 = vpop.trf.xlu0
      %v2556 = vpop.trf.xlu0
      %v2557 = vpop.trf.xlu0
      %v2558 = vpop.trf.xlu0
      %v2559 = vpop.trf.xlu0
      %v2560 = vpop.trf.xlu0
      %v2561 = vpop.trf.xlu0
      %v2562 = vpop.trf.xlu0
      %v2563 = vpop.trf.xlu0
      %v2564 = vpop.trf.xlu0
      %v2565 = vpop.trf.xlu0
      %v2566 = vpop.trf.xlu0
      %v2567 = vpop.trf.xlu0
      %v2568 = vpop.trf.xlu0
      %v2569 = vpop.trf.xlu0
      %v2573 = vcombine.low %v2490, %v2522
      %v2575 = vunpack.c.l.s4 1966171168
      %v2576 = vunpack.c.0.s8 %v2575
      %v2577 = vlaneseq
      %v2578 = vshrl.u32 %v2577, 7
      %v2579 = vsub.s32 %v2576, %v2578
      %v2580 = vrot.slane %v2573, %v2579
      %v2582 = vunpack.c.l.s4 1966171168
      %v2583 = vunpack.c.0.s8 %v2582
      %v2584 = vlaneseq
      %v2585 = vshrl.u32 %v2584, 7
      %v2586 = vsub.s32 %v2583, %v2585
      %v2587 = vrot.slane %v2554, %v2586
      %v2588 = vcombine.low %v2580, %v2587
      %v2590 = vunpack.c.l.s4 1966171168
      %v2591 = vunpack.c.0.s8 %v2590
      %v2592 = vlaneseq
      %v2593 = vshrl.u32 %v2592, 7
      %v2594 = vsub.s32 %v2591, %v2593
      %v2595 = vrot.slane %v2588, %v2594
      %v2597 = vlaneseq
      %vm2598 = vcmp.ge.s32.totalorder %v2597, 0
      %vm2599 = vcmp.lt.s32.totalorder %v2597, 304
      %vm2600 = vmand %vm2598, %vm2599
      %2601 = vst.msk [vmem:[%s354] sm:$0x7] %vm2600, %v2595
      %p2602 = scmp.lt.s32.totalorder %s22, 1
      %s2603 = scalar_select %p2602, %s22, 1
      %s2604 = smul.addr %s2603, 3
      %s2605 = scalar_lea.vmem %s9, %s2604
      // Predicated region
      $region57: #{termination_head.1} parent=55 // pred_check
        %p2606 = pneg %p234
      $region58: #{termination_head.1} parent=55 // pred_check_branch
        %2608 = sbr.rel (%p2606) target = $region60
      $region59: #{termination_head.1} parent=55 // pred_region
        _
      $region60: #{termination_head.1} parent=55 // pred_fallthru
        _
    $region56: #{termination_head.1} parent=5 // pred_fallthru
      _
    %p2609 = scmp.le.s32.totalorder 2, %s17
    // Predicated region
    $region61: #{termination_head.1} parent=5 // pred_check
      %p2610 = pneg %p2609
    $region62: #{termination_head.1} parent=5 // pred_check_branch
      %2612 = sbr.rel (%p2610) target = $region64
    $region63: #{termination_head.1} parent=5 // pred_region
      %s2613 = ssub.s32 %s17, 2
      // Predicated region
      $region65: #{termination_head.1} parent=63 // pred_check
        %p2614 = pneg %p240
      $region66: #{termination_head.1} parent=63 // pred_check_branch
        %2616 = sbr.rel (%p2614) target = $region68
      $region67: #{termination_head.1} parent=63 // pred_region
        %p2617 = scmp.lt.s32.totalorder %s23, 1
        %s2618 = scalar_select %p2617, %s23, 1
        %s2619 = smul.addr %s2618, 3
        %s2620 = scalar_lea.vmem %s9, %s2619
      $region68: #{termination_head.1} parent=63 // pred_fallthru
        _
    $region64: #{termination_head.1} parent=5 // pred_fallthru
      _
  $region6: #{termination_head.1} parent=0 // loop_footer
    %s21 = sadd.s32 1, %s17
  $region7: #{termination_head.1} parent=0 // loop_footer_branch
    %16 = sbr.rel target = $region3
  $region8: #{termination_head.1} parent=0 // loop_exit
    _

</llo_original>
